<compile_context>
chip_gen: v5e
topology: v5e:2x2
jax: 0.10.0
libtpu: 0.0.40
codegen_flags: <defaults>
</compile_context>

<pallas_src>
import jax
import jax.numpy as jnp
from jax.experimental import pallas as pl
from jax.experimental.pallas import tpu as pltpu


# ------------------------------------------------------------------- kernel --
def seq2seq_kernel(src_ref, x0_ref,
                   enc_wx_ref, enc_wh_ref, enc_b_ref,
                   dec_wx_ref, dec_wh_ref, dec_b_ref,
                   fc_w_ref, fc_b_ref,
                   out_ref):
    S, B, _ = src_ref.shape            # (S, B, D) time-major source, batch padded to 8
    H = enc_wh_ref.shape[0]            # hidden dim (32)
    T, _, OP = out_ref.shape           # (T, B, OP) decoder logits, OP = 128 lane-dense

    # Load weights once; hoist bias broadcasts out of the (unrolled) time loops.
    enc_wx = enc_wx_ref[...]           # (D, 4H)
    enc_wh = enc_wh_ref[...]           # (H, 4H)
    dec_wx = dec_wx_ref[...]           # (OP, 4H)  zero rows beyond the real O
    dec_wh = dec_wh_ref[...]           # (H, 4H)
    fc_w = fc_w_ref[...]               # (H, OP)   zero cols beyond the real O
    enc_b = jnp.broadcast_to(enc_b_ref[...], (B, 4 * H))
    dec_b = jnp.broadcast_to(dec_b_ref[...], (B, 4 * H))
    fc_b = jnp.broadcast_to(fc_b_ref[...], (B, OP))   # -1e30 in padded lanes

    def lstm_cell(x, h, c, wx, wh, b):
        # PyTorch gate order (i, f, g, o); 4H = 128 -> `gates` is exactly one lane group.
        gates = (jnp.dot(x, wx, preferred_element_type=jnp.float32)
                 + jnp.dot(h, wh, preferred_element_type=jnp.float32)
                 + b)                                  # (B, 4H)
        # Activate the FULL gate vreg once (2 EUP pushes), then extract lane groups with
        # explicit XLU rotations instead of arbitrary-offset lane slices.
        sig = jax.nn.sigmoid(gates)                    # (B, 4H)
        th = jnp.tanh(gates)                           # (B, 4H)
        i = sig[:, :H]                                 # lanes [0, H)      already in place
        f = pltpu.roll(sig, shift=3 * H, axis=1)[:, :H]   # lanes [H, 2H)  -> [0, H)
        g = pltpu.roll(th, shift=2 * H, axis=1)[:, :H]    # lanes [2H, 3H) -> [0, H)
        o = pltpu.roll(sig, shift=H, axis=1)[:, :H]       # lanes [3H, 4H) -> [0, H)
        c_new = f * c + i * g
        h_new = o * jnp.tanh(c_new)                    # 3rd and final EUP push of the step
        return h_new, c_new

    # ---- encoder: zero-initialized LSTM over the source (states stay in vregs) ----------
    h = jnp.zeros((B, H), jnp.float32)
    c = jnp.zeros((B, H), jnp.float32)
    for t in range(S):                 # static trip count -> fully unrolled at trace time
        h, c = lstm_cell(src_ref[t], h, c, enc_wx, enc_wh, enc_b)

    # ---- decoder: LSTM + FC with greedy one-hot feedback --------------------------------
    x = x0_ref[...]                    # (B, OP) first target step, zero-padded lanes >= O
    iota = jax.lax.broadcasted_iota(jnp.int32, (B, OP), 1)
    for t in range(T):                 # static trip count -> fully unrolled
        h, c = lstm_cell(x, h, c, dec_wx, dec_wh, dec_b)
        logits = jnp.dot(h, fc_w, preferred_element_type=jnp.float32) + fc_b   # (B, OP)
        out_ref[t] = logits            # static-index, unmasked full-lane store
        # Greedy feedback: one-hot of the FIRST max index (matches torch argmax / topk).
        # Padded lanes hold -1e30 via fc_b so they can never win the max.
        max_val = jnp.max(logits, axis=-1, keepdims=True)
        first_idx = jnp.min(jnp.where(logits == max_val, iota, OP),
                            axis=-1, keepdims=True)
        x = (iota == first_idx).astype(jnp.float32)


# ------------------------------------------------------------- init-time prep --
def prepare_params(params, o_pad=128):
    """One-time weight preparation (transposes + lane padding), OUT of the per-call path."""
    H = params["enc_whh"].shape[1]
    O = params["fc_w"].shape[0]
    dec_wx_p = jnp.zeros((o_pad, 4 * H), jnp.float32).at[:O, :].set(params["dec_wih"].T)
    fc_w_p = jnp.zeros((H, o_pad), jnp.float32).at[:, :O].set(params["fc_w"].T)
    fc_b_p = jnp.full((1, o_pad), -1e30, jnp.float32).at[:, :O].set(params["fc_b"])
    return {
        "enc_wx": jnp.asarray(params["enc_wih"].T, jnp.float32),   # (D, 4H)
        "enc_wh": jnp.asarray(params["enc_whh"].T, jnp.float32),   # (H, 4H)
        "enc_b": jnp.asarray(params["enc_b"], jnp.float32),        # (1, 4H)
        "dec_wx": dec_wx_p,                                        # (OP, 4H)
        "dec_wh": jnp.asarray(params["dec_whh"].T, jnp.float32),   # (H, 4H)
        "dec_b": jnp.asarray(params["dec_b"], jnp.float32),        # (1, 4H)
        "fc_w": fc_w_p,                                            # (H, OP)
        "fc_b": fc_b_p,                                            # (1, OP)
        "o": O,
    }


# ------------------------------------------------------------------ wrapper --
@jax.jit
def _seq2seq_forward_jit(src, trg, prep):
    """src: (B, S, D), trg: (B, T, O).  Returns (T, B, O) decoder logits."""
    B, S, D = src.shape
    T, O = trg.shape[1], trg.shape[2]
    OP = prep["fc_w"].shape[1]
    Bp = ((B + 7) // 8) * 8

    # Per-call data prep lives inside this single jitted executable (one dispatch).
    src_p = jnp.pad(src, ((0, Bp - B), (0, 0), (0, 0)))
    src_t = jnp.transpose(src_p, (1, 0, 2))                         # (S, Bp, D) time-major
    x0_p = jnp.pad(trg[:, 0, :], ((0, Bp - B), (0, OP - O)))        # (Bp, OP)

    out = pl.pallas_call(
        seq2seq_kernel,
        out_shape=jax.ShapeDtypeStruct((T, Bp, OP), jnp.float32),
        # No grid: the whole (tiny) problem runs in one invocation, all operands in VMEM.
    )(src_t, x0_p,
      prep["enc_wx"], prep["enc_wh"], prep["enc_b"],
      prep["dec_wx"], prep["dec_wh"], prep["dec_b"],
      prep["fc_w"], prep["fc_b"])

    return out[:, :B, :O]                                           # (T, B, O)


def seq2seq_forward(src, trg, prep, teacher_forcing_ratio=0.0):
    del teacher_forcing_ratio          # torch.rand(1) < 0 is always False in the reference
    return _seq2seq_forward_jit(src, trg, prep)


# -------------------------------------------------------------- pure-JAX ref --
def _lstm_step(x, h, c, wih, whh, b):
    H = h.shape[-1]
    gates = x @ wih.T + h @ whh.T + b
    i = jax.nn.sigmoid(gates[:, :H])
    f = jax.nn.sigmoid(gates[:, H:2 * H])
    g = jnp.tanh(gates[:, 2 * H:3 * H])
    o = jax.nn.sigmoid(gates[:, 3 * H:])
    c = f * c + i * g
    return o * jnp.tanh(c), c


def seq2seq_ref(src, trg, params):
    B, S, _ = src.shape
    H = params["enc_whh"].shape[1]
    h = jnp.zeros((B, H), jnp.float32)
    c = jnp.zeros((B, H), jnp.float32)
    for t in range(S):
        h, c = _lstm_step(src[:, t], h, c,
                          params["enc_wih"], params["enc_whh"], params["enc_b"])
    x = trg[:, 0, :]
    outs = []
    for _ in range(trg.shape[1]):
        h, c = _lstm_step(x, h, c, params["dec_wih"], params["dec_whh"], params["dec_b"])
        logits = h @ params["fc_w"].T + params["fc_b"]
        outs.append(logits)
        x = jax.nn.one_hot(jnp.argmax(logits, axis=-1), logits.shape[-1], dtype=jnp.float32)
    return outs


# ---------------------------------------------------------------------- main --
if __name__ == "__main__":
    B, S, T = 2, 6, 5          # batch, src length, trg length
    D_IN, H, O = 8, 32, 16     # encoder input dim, hidden dim, decoder output dim

    key = jax.random.PRNGKey(0)
    ks = jax.random.split(key, 10)
    scale = 0.1
    params = {
        "enc_wih": scale * jax.random.normal(ks[0], (4 * H, D_IN), jnp.float32),
        "enc_whh": scale * jax.random.normal(ks[1], (4 * H, H), jnp.float32),
        "enc_b":   (scale * jax.random.normal(ks[2], (1, 4 * H), jnp.float32)
                    + scale * jax.random.normal(ks[3], (1, 4 * H), jnp.float32)),  # b_ih+b_hh
        "dec_wih": scale * jax.random.normal(ks[4], (4 * H, O), jnp.float32),
        "dec_whh": scale * jax.random.normal(ks[5], (4 * H, H), jnp.float32),
        "dec_b":   (scale * jax.random.normal(ks[6], (1, 4 * H), jnp.float32)
                    + scale * jax.random.normal(ks[7], (1, 4 * H), jnp.float32)),
        "fc_w":    scale * jax.random.normal(ks[8], (O, H), jnp.float32),
        "fc_b":    scale * jax.random.normal(ks[9], (1, O), jnp.float32),
    }

    src = jax.random.normal(jax.random.PRNGKey(1), (B, S, D_IN), jnp.float32)
    trg = jax.random.normal(jax.random.PRNGKey(2), (B, T, O), jnp.float32)

    prep = prepare_params(params)                       # one-time weight prep (not hot path)
    out = seq2seq_forward(src, trg, prep, teacher_forcing_ratio=0.5)   # (T, B, O)
    out = jax.block_until_ready(out)

    ref_outputs = seq2seq_ref(src, trg, params)
    assert out.shape == (T, B, O)
    for t, want in enumerate(ref_outputs):
        assert jnp.allclose(out[t], want, atol=1e-5, rtol=1e-5), \
            f"mismatch vs. pure-JAX reference at step {t}"

    print("KERNEL_OK")
</pallas_src>

<mosaic_0001>
module attributes {stable_mosaic.version = 11 : i64} {
  func.func @seq2seq_kernel(%arg0: memref<6x8x8xf32, #tpu.memory_space<vmem>>, %arg1: memref<8x128xf32, #tpu.memory_space<vmem>>, %arg2: memref<8x128xf32, #tpu.memory_space<vmem>>, %arg3: memref<32x128xf32, #tpu.memory_space<vmem>>, %arg4: memref<1x128xf32, #tpu.memory_space<vmem>>, %arg5: memref<128x128xf32, #tpu.memory_space<vmem>>, %arg6: memref<32x128xf32, #tpu.memory_space<vmem>>, %arg7: memref<1x128xf32, #tpu.memory_space<vmem>>, %arg8: memref<32x128xf32, #tpu.memory_space<vmem>>, %arg9: memref<1x128xf32, #tpu.memory_space<vmem>>, %arg10: memref<5x8x128xf32, #tpu.memory_space<vmem>>) attributes {dimension_semantics = [], scalar_prefetch = 0 : i64, scratch_operands = 0 : i64, tpu.core_type = #tpu.core_type<tc>} {
    %c0 = arith.constant 0 : index
    %c0_0 = arith.constant 0 : index
    %0 = vector.load %arg2[%c0, %c0_0] : memref<8x128xf32, #tpu.memory_space<vmem>>, vector<8x128xf32>
    %c0_1 = arith.constant 0 : index
    %c0_2 = arith.constant 0 : index
    %1 = vector.load %arg3[%c0_1, %c0_2] : memref<32x128xf32, #tpu.memory_space<vmem>>, vector<32x128xf32>
    %c0_3 = arith.constant 0 : index
    %c0_4 = arith.constant 0 : index
    %2 = vector.load %arg5[%c0_3, %c0_4] : memref<128x128xf32, #tpu.memory_space<vmem>>, vector<128x128xf32>
    %c0_5 = arith.constant 0 : index
    %c0_6 = arith.constant 0 : index
    %3 = vector.load %arg6[%c0_5, %c0_6] : memref<32x128xf32, #tpu.memory_space<vmem>>, vector<32x128xf32>
    %c0_7 = arith.constant 0 : index
    %c0_8 = arith.constant 0 : index
    %4 = vector.load %arg8[%c0_7, %c0_8] : memref<32x128xf32, #tpu.memory_space<vmem>>, vector<32x128xf32>
    %c0_9 = arith.constant 0 : index
    %c0_10 = arith.constant 0 : index
    %5 = vector.load %arg4[%c0_9, %c0_10] : memref<1x128xf32, #tpu.memory_space<vmem>>, vector<1x128xf32>
    %6 = vector.shape_cast %5 : vector<1x128xf32> to vector<1x128xf32>
    %7 = vector.broadcast %6 : vector<1x128xf32> to vector<8x128xf32>
    %c0_11 = arith.constant 0 : index
    %c0_12 = arith.constant 0 : index
    %8 = vector.load %arg7[%c0_11, %c0_12] : memref<1x128xf32, #tpu.memory_space<vmem>>, vector<1x128xf32>
    %9 = vector.shape_cast %8 : vector<1x128xf32> to vector<1x128xf32>
    %10 = vector.broadcast %9 : vector<1x128xf32> to vector<8x128xf32>
    %c0_13 = arith.constant 0 : index
    %c0_14 = arith.constant 0 : index
    %11 = vector.load %arg9[%c0_13, %c0_14] : memref<1x128xf32, #tpu.memory_space<vmem>>, vector<1x128xf32>
    %12 = vector.shape_cast %11 : vector<1x128xf32> to vector<1x128xf32>
    %13 = vector.broadcast %12 : vector<1x128xf32> to vector<8x128xf32>
    %cst = arith.constant 0.000000e+00 : f32
    %14 = vector.broadcast %cst : f32 to vector<8x32xf32>
    %cst_15 = arith.constant 0.000000e+00 : f32
    %15 = vector.broadcast %cst_15 : f32 to vector<8x32xf32>
    %c0_16 = arith.constant 0 : index
    %c0_17 = arith.constant 0 : index
    %c0_18 = arith.constant 0 : index
    %16 = vector.load %arg0[%c0_16, %c0_17, %c0_18] : memref<6x8x8xf32, #tpu.memory_space<vmem>>, vector<1x8x8xf32>
    %17 = vector.shape_cast %16 : vector<1x8x8xf32> to vector<8x8xf32>
    %cst_19 = arith.constant dense<0.000000e+00> : vector<8x128xf32>
    %18 = tpu.matmul %17, %0, %cst_19 {dimension_numbers = #tpu.dot_dimension_numbers<[1], [0], [0], [1], [0, 0, 1, 1], [], []>} : vector<8x8xf32>, vector<8x128xf32>, vector<8x128xf32> -> vector<8x128xf32>
    %cst_20 = arith.constant dense<0.000000e+00> : vector<8x128xf32>
    %19 = tpu.matmul %14, %1, %cst_20 {dimension_numbers = #tpu.dot_dimension_numbers<[1], [0], [0], [1], [0, 0, 1, 1], [], []>} : vector<8x32xf32>, vector<32x128xf32>, vector<8x128xf32> -> vector<8x128xf32>
    %20 = arith.addf %18, %19 : vector<8x128xf32>
    %21 = arith.addf %20, %7 : vector<8x128xf32>
    %22 = arith.negf %21 : vector<8x128xf32>
    %23 = math.exp %22 : vector<8x128xf32>
    %cst_21 = arith.constant 1.000000e+00 : f32
    %24 = vector.broadcast %cst_21 : f32 to vector<8x128xf32>
    %25 = arith.addf %24, %23 : vector<8x128xf32>
    %26 = arith.divf %24, %25 : vector<8x128xf32>
    %27 = math.tanh %21 : vector<8x128xf32>
    %28 = vector.extract_strided_slice %26 {offsets = [0, 0], sizes = [8, 32], strides = [1, 1]} : vector<8x128xf32> to vector<8x32xf32>
    %c96_i32 = arith.constant 96 : i32
    %29 = tpu.dynamic_rotate %26 by %c96_i32 dim 1 : vector<8x128xf32>, i32 -> vector<8x128xf32>
    %30 = vector.extract_strided_slice %29 {offsets = [0, 0], sizes = [8, 32], strides = [1, 1]} : vector<8x128xf32> to vector<8x32xf32>
    %c64_i32 = arith.constant 64 : i32
    %31 = tpu.dynamic_rotate %27 by %c64_i32 dim 1 : vector<8x128xf32>, i32 -> vector<8x128xf32>
    %32 = vector.extract_strided_slice %31 {offsets = [0, 0], sizes = [8, 32], strides = [1, 1]} : vector<8x128xf32> to vector<8x32xf32>
    %c32_i32 = arith.constant 32 : i32
    %33 = tpu.dynamic_rotate %26 by %c32_i32 dim 1 : vector<8x128xf32>, i32 -> vector<8x128xf32>
    %34 = vector.extract_strided_slice %33 {offsets = [0, 0], sizes = [8, 32], strides = [1, 1]} : vector<8x128xf32> to vector<8x32xf32>
    %35 = arith.mulf %30, %15 : vector<8x32xf32>
    %36 = arith.mulf %28, %32 : vector<8x32xf32>
    %37 = arith.addf %35, %36 : vector<8x32xf32>
    %38 = math.tanh %37 : vector<8x32xf32>
    %39 = arith.mulf %34, %38 : vector<8x32xf32>
    %c1 = arith.constant 1 : index
    %c0_22 = arith.constant 0 : index
    %c0_23 = arith.constant 0 : index
    %40 = vector.load %arg0[%c1, %c0_22, %c0_23] : memref<6x8x8xf32, #tpu.memory_space<vmem>>, vector<1x8x8xf32>
    %41 = vector.shape_cast %40 : vector<1x8x8xf32> to vector<8x8xf32>
    %cst_24 = arith.constant dense<0.000000e+00> : vector<8x128xf32>
    %42 = tpu.matmul %41, %0, %cst_24 {dimension_numbers = #tpu.dot_dimension_numbers<[1], [0], [0], [1], [0, 0, 1, 1], [], []>} : vector<8x8xf32>, vector<8x128xf32>, vector<8x128xf32> -> vector<8x128xf32>
    %cst_25 = arith.constant dense<0.000000e+00> : vector<8x128xf32>
    %43 = tpu.matmul %39, %1, %cst_25 {dimension_numbers = #tpu.dot_dimension_numbers<[1], [0], [0], [1], [0, 0, 1, 1], [], []>} : vector<8x32xf32>, vector<32x128xf32>, vector<8x128xf32> -> vector<8x128xf32>
    %44 = arith.addf %42, %43 : vector<8x128xf32>
    %45 = arith.addf %44, %7 : vector<8x128xf32>
    %46 = arith.negf %45 : vector<8x128xf32>
    %47 = math.exp %46 : vector<8x128xf32>
    %cst_26 = arith.constant 1.000000e+00 : f32
    %48 = vector.broadcast %cst_26 : f32 to vector<8x128xf32>
    %49 = arith.addf %48, %47 : vector<8x128xf32>
    %50 = arith.divf %48, %49 : vector<8x128xf32>
    %51 = math.tanh %45 : vector<8x128xf32>
    %52 = vector.extract_strided_slice %50 {offsets = [0, 0], sizes = [8, 32], strides = [1, 1]} : vector<8x128xf32> to vector<8x32xf32>
    %c96_i32_27 = arith.constant 96 : i32
    %53 = tpu.dynamic_rotate %50 by %c96_i32_27 dim 1 : vector<8x128xf32>, i32 -> vector<8x128xf32>
    %54 = vector.extract_strided_slice %53 {offsets = [0, 0], sizes = [8, 32], strides = [1, 1]} : vector<8x128xf32> to vector<8x32xf32>
    %c64_i32_28 = arith.constant 64 : i32
    %55 = tpu.dynamic_rotate %51 by %c64_i32_28 dim 1 : vector<8x128xf32>, i32 -> vector<8x128xf32>
    %56 = vector.extract_strided_slice %55 {offsets = [0, 0], sizes = [8, 32], strides = [1, 1]} : vector<8x128xf32> to vector<8x32xf32>
    %c32_i32_29 = arith.constant 32 : i32
    %57 = tpu.dynamic_rotate %50 by %c32_i32_29 dim 1 : vector<8x128xf32>, i32 -> vector<8x128xf32>
    %58 = vector.extract_strided_slice %57 {offsets = [0, 0], sizes = [8, 32], strides = [1, 1]} : vector<8x128xf32> to vector<8x32xf32>
    %59 = arith.mulf %54, %37 : vector<8x32xf32>
    %60 = arith.mulf %52, %56 : vector<8x32xf32>
    %61 = arith.addf %59, %60 : vector<8x32xf32>
    %62 = math.tanh %61 : vector<8x32xf32>
    %63 = arith.mulf %58, %62 : vector<8x32xf32>
    %c2 = arith.constant 2 : index
    %c0_30 = arith.constant 0 : index
    %c0_31 = arith.constant 0 : index
    %64 = vector.load %arg0[%c2, %c0_30, %c0_31] : memref<6x8x8xf32, #tpu.memory_space<vmem>>, vector<1x8x8xf32>
    %65 = vector.shape_cast %64 : vector<1x8x8xf32> to vector<8x8xf32>
    %cst_32 = arith.constant dense<0.000000e+00> : vector<8x128xf32>
    %66 = tpu.matmul %65, %0, %cst_32 {dimension_numbers = #tpu.dot_dimension_numbers<[1], [0], [0], [1], [0, 0, 1, 1], [], []>} : vector<8x8xf32>, vector<8x128xf32>, vector<8x128xf32> -> vector<8x128xf32>
    %cst_33 = arith.constant dense<0.000000e+00> : vector<8x128xf32>
    %67 = tpu.matmul %63, %1, %cst_33 {dimension_numbers = #tpu.dot_dimension_numbers<[1], [0], [0], [1], [0, 0, 1, 1], [], []>} : vector<8x32xf32>, vector<32x128xf32>, vector<8x128xf32> -> vector<8x128xf32>
    %68 = arith.addf %66, %67 : vector<8x128xf32>
    %69 = arith.addf %68, %7 : vector<8x128xf32>
    %70 = arith.negf %69 : vector<8x128xf32>
    %71 = math.exp %70 : vector<8x128xf32>
    %cst_34 = arith.constant 1.000000e+00 : f32
    %72 = vector.broadcast %cst_34 : f32 to vector<8x128xf32>
    %73 = arith.addf %72, %71 : vector<8x128xf32>
    %74 = arith.divf %72, %73 : vector<8x128xf32>
    %75 = math.tanh %69 : vector<8x128xf32>
    %76 = vector.extract_strided_slice %74 {offsets = [0, 0], sizes = [8, 32], strides = [1, 1]} : vector<8x128xf32> to vector<8x32xf32>
    %c96_i32_35 = arith.constant 96 : i32
    %77 = tpu.dynamic_rotate %74 by %c96_i32_35 dim 1 : vector<8x128xf32>, i32 -> vector<8x128xf32>
    %78 = vector.extract_strided_slice %77 {offsets = [0, 0], sizes = [8, 32], strides = [1, 1]} : vector<8x128xf32> to vector<8x32xf32>
    %c64_i32_36 = arith.constant 64 : i32
    %79 = tpu.dynamic_rotate %75 by %c64_i32_36 dim 1 : vector<8x128xf32>, i32 -> vector<8x128xf32>
    %80 = vector.extract_strided_slice %79 {offsets = [0, 0], sizes = [8, 32], strides = [1, 1]} : vector<8x128xf32> to vector<8x32xf32>
    %c32_i32_37 = arith.constant 32 : i32
    %81 = tpu.dynamic_rotate %74 by %c32_i32_37 dim 1 : vector<8x128xf32>, i32 -> vector<8x128xf32>
    %82 = vector.extract_strided_slice %81 {offsets = [0, 0], sizes = [8, 32], strides = [1, 1]} : vector<8x128xf32> to vector<8x32xf32>
    %83 = arith.mulf %78, %61 : vector<8x32xf32>
    %84 = arith.mulf %76, %80 : vector<8x32xf32>
    %85 = arith.addf %83, %84 : vector<8x32xf32>
    %86 = math.tanh %85 : vector<8x32xf32>
    %87 = arith.mulf %82, %86 : vector<8x32xf32>
    %c3 = arith.constant 3 : index
    %c0_38 = arith.constant 0 : index
    %c0_39 = arith.constant 0 : index
    %88 = vector.load %arg0[%c3, %c0_38, %c0_39] : memref<6x8x8xf32, #tpu.memory_space<vmem>>, vector<1x8x8xf32>
    %89 = vector.shape_cast %88 : vector<1x8x8xf32> to vector<8x8xf32>
    %cst_40 = arith.constant dense<0.000000e+00> : vector<8x128xf32>
    %90 = tpu.matmul %89, %0, %cst_40 {dimension_numbers = #tpu.dot_dimension_numbers<[1], [0], [0], [1], [0, 0, 1, 1], [], []>} : vector<8x8xf32>, vector<8x128xf32>, vector<8x128xf32> -> vector<8x128xf32>
    %cst_41 = arith.constant dense<0.000000e+00> : vector<8x128xf32>
    %91 = tpu.matmul %87, %1, %cst_41 {dimension_numbers = #tpu.dot_dimension_numbers<[1], [0], [0], [1], [0, 0, 1, 1], [], []>} : vector<8x32xf32>, vector<32x128xf32>, vector<8x128xf32> -> vector<8x128xf32>
    %92 = arith.addf %90, %91 : vector<8x128xf32>
    %93 = arith.addf %92, %7 : vector<8x128xf32>
    %94 = arith.negf %93 : vector<8x128xf32>
    %95 = math.exp %94 : vector<8x128xf32>
    %cst_42 = arith.constant 1.000000e+00 : f32
    %96 = vector.broadcast %cst_42 : f32 to vector<8x128xf32>
    %97 = arith.addf %96, %95 : vector<8x128xf32>
    %98 = arith.divf %96, %97 : vector<8x128xf32>
    %99 = math.tanh %93 : vector<8x128xf32>
    %100 = vector.extract_strided_slice %98 {offsets = [0, 0], sizes = [8, 32], strides = [1, 1]} : vector<8x128xf32> to vector<8x32xf32>
    %c96_i32_43 = arith.constant 96 : i32
    %101 = tpu.dynamic_rotate %98 by %c96_i32_43 dim 1 : vector<8x128xf32>, i32 -> vector<8x128xf32>
    %102 = vector.extract_strided_slice %101 {offsets = [0, 0], sizes = [8, 32], strides = [1, 1]} : vector<8x128xf32> to vector<8x32xf32>
    %c64_i32_44 = arith.constant 64 : i32
    %103 = tpu.dynamic_rotate %99 by %c64_i32_44 dim 1 : vector<8x128xf32>, i32 -> vector<8x128xf32>
    %104 = vector.extract_strided_slice %103 {offsets = [0, 0], sizes = [8, 32], strides = [1, 1]} : vector<8x128xf32> to vector<8x32xf32>
    %c32_i32_45 = arith.constant 32 : i32
    %105 = tpu.dynamic_rotate %98 by %c32_i32_45 dim 1 : vector<8x128xf32>, i32 -> vector<8x128xf32>
    %106 = vector.extract_strided_slice %105 {offsets = [0, 0], sizes = [8, 32], strides = [1, 1]} : vector<8x128xf32> to vector<8x32xf32>
    %107 = arith.mulf %102, %85 : vector<8x32xf32>
    %108 = arith.mulf %100, %104 : vector<8x32xf32>
    %109 = arith.addf %107, %108 : vector<8x32xf32>
    %110 = math.tanh %109 : vector<8x32xf32>
    %111 = arith.mulf %106, %110 : vector<8x32xf32>
    %c4 = arith.constant 4 : index
    %c0_46 = arith.constant 0 : index
    %c0_47 = arith.constant 0 : index
    %112 = vector.load %arg0[%c4, %c0_46, %c0_47] : memref<6x8x8xf32, #tpu.memory_space<vmem>>, vector<1x8x8xf32>
    %113 = vector.shape_cast %112 : vector<1x8x8xf32> to vector<8x8xf32>
    %cst_48 = arith.constant dense<0.000000e+00> : vector<8x128xf32>
    %114 = tpu.matmul %113, %0, %cst_48 {dimension_numbers = #tpu.dot_dimension_numbers<[1], [0], [0], [1], [0, 0, 1, 1], [], []>} : vector<8x8xf32>, vector<8x128xf32>, vector<8x128xf32> -> vector<8x128xf32>
    %cst_49 = arith.constant dense<0.000000e+00> : vector<8x128xf32>
    %115 = tpu.matmul %111, %1, %cst_49 {dimension_numbers = #tpu.dot_dimension_numbers<[1], [0], [0], [1], [0, 0, 1, 1], [], []>} : vector<8x32xf32>, vector<32x128xf32>, vector<8x128xf32> -> vector<8x128xf32>
    %116 = arith.addf %114, %115 : vector<8x128xf32>
    %117 = arith.addf %116, %7 : vector<8x128xf32>
    %118 = arith.negf %117 : vector<8x128xf32>
    %119 = math.exp %118 : vector<8x128xf32>
    %cst_50 = arith.constant 1.000000e+00 : f32
    %120 = vector.broadcast %cst_50 : f32 to vector<8x128xf32>
    %121 = arith.addf %120, %119 : vector<8x128xf32>
    %122 = arith.divf %120, %121 : vector<8x128xf32>
    %123 = math.tanh %117 : vector<8x128xf32>
    %124 = vector.extract_strided_slice %122 {offsets = [0, 0], sizes = [8, 32], strides = [1, 1]} : vector<8x128xf32> to vector<8x32xf32>
    %c96_i32_51 = arith.constant 96 : i32
    %125 = tpu.dynamic_rotate %122 by %c96_i32_51 dim 1 : vector<8x128xf32>, i32 -> vector<8x128xf32>
    %126 = vector.extract_strided_slice %125 {offsets = [0, 0], sizes = [8, 32], strides = [1, 1]} : vector<8x128xf32> to vector<8x32xf32>
    %c64_i32_52 = arith.constant 64 : i32
    %127 = tpu.dynamic_rotate %123 by %c64_i32_52 dim 1 : vector<8x128xf32>, i32 -> vector<8x128xf32>
    %128 = vector.extract_strided_slice %127 {offsets = [0, 0], sizes = [8, 32], strides = [1, 1]} : vector<8x128xf32> to vector<8x32xf32>
    %c32_i32_53 = arith.constant 32 : i32
    %129 = tpu.dynamic_rotate %122 by %c32_i32_53 dim 1 : vector<8x128xf32>, i32 -> vector<8x128xf32>
    %130 = vector.extract_strided_slice %129 {offsets = [0, 0], sizes = [8, 32], strides = [1, 1]} : vector<8x128xf32> to vector<8x32xf32>
    %131 = arith.mulf %126, %109 : vector<8x32xf32>
    %132 = arith.mulf %124, %128 : vector<8x32xf32>
    %133 = arith.addf %131, %132 : vector<8x32xf32>
    %134 = math.tanh %133 : vector<8x32xf32>
    %135 = arith.mulf %130, %134 : vector<8x32xf32>
    %c5 = arith.constant 5 : index
    %c0_54 = arith.constant 0 : index
    %c0_55 = arith.constant 0 : index
    %136 = vector.load %arg0[%c5, %c0_54, %c0_55] : memref<6x8x8xf32, #tpu.memory_space<vmem>>, vector<1x8x8xf32>
    %137 = vector.shape_cast %136 : vector<1x8x8xf32> to vector<8x8xf32>
    %cst_56 = arith.constant dense<0.000000e+00> : vector<8x128xf32>
    %138 = tpu.matmul %137, %0, %cst_56 {dimension_numbers = #tpu.dot_dimension_numbers<[1], [0], [0], [1], [0, 0, 1, 1], [], []>} : vector<8x8xf32>, vector<8x128xf32>, vector<8x128xf32> -> vector<8x128xf32>
    %cst_57 = arith.constant dense<0.000000e+00> : vector<8x128xf32>
    %139 = tpu.matmul %135, %1, %cst_57 {dimension_numbers = #tpu.dot_dimension_numbers<[1], [0], [0], [1], [0, 0, 1, 1], [], []>} : vector<8x32xf32>, vector<32x128xf32>, vector<8x128xf32> -> vector<8x128xf32>
    %140 = arith.addf %138, %139 : vector<8x128xf32>
    %141 = arith.addf %140, %7 : vector<8x128xf32>
    %142 = arith.negf %141 : vector<8x128xf32>
    %143 = math.exp %142 : vector<8x128xf32>
    %cst_58 = arith.constant 1.000000e+00 : f32
    %144 = vector.broadcast %cst_58 : f32 to vector<8x128xf32>
    %145 = arith.addf %144, %143 : vector<8x128xf32>
    %146 = arith.divf %144, %145 : vector<8x128xf32>
    %147 = math.tanh %141 : vector<8x128xf32>
    %148 = vector.extract_strided_slice %146 {offsets = [0, 0], sizes = [8, 32], strides = [1, 1]} : vector<8x128xf32> to vector<8x32xf32>
    %c96_i32_59 = arith.constant 96 : i32
    %149 = tpu.dynamic_rotate %146 by %c96_i32_59 dim 1 : vector<8x128xf32>, i32 -> vector<8x128xf32>
    %150 = vector.extract_strided_slice %149 {offsets = [0, 0], sizes = [8, 32], strides = [1, 1]} : vector<8x128xf32> to vector<8x32xf32>
    %c64_i32_60 = arith.constant 64 : i32
    %151 = tpu.dynamic_rotate %147 by %c64_i32_60 dim 1 : vector<8x128xf32>, i32 -> vector<8x128xf32>
    %152 = vector.extract_strided_slice %151 {offsets = [0, 0], sizes = [8, 32], strides = [1, 1]} : vector<8x128xf32> to vector<8x32xf32>
    %c32_i32_61 = arith.constant 32 : i32
    %153 = tpu.dynamic_rotate %146 by %c32_i32_61 dim 1 : vector<8x128xf32>, i32 -> vector<8x128xf32>
    %154 = vector.extract_strided_slice %153 {offsets = [0, 0], sizes = [8, 32], strides = [1, 1]} : vector<8x128xf32> to vector<8x32xf32>
    %155 = arith.mulf %150, %133 : vector<8x32xf32>
    %156 = arith.mulf %148, %152 : vector<8x32xf32>
    %157 = arith.addf %155, %156 : vector<8x32xf32>
    %158 = math.tanh %157 : vector<8x32xf32>
    %159 = arith.mulf %154, %158 : vector<8x32xf32>
    %c0_62 = arith.constant 0 : index
    %c0_63 = arith.constant 0 : index
    %160 = vector.load %arg1[%c0_62, %c0_63] : memref<8x128xf32, #tpu.memory_space<vmem>>, vector<8x128xf32>
    %161 = tpu.iota {dimensions = array<i32: 1>} : vector<8x128xi32>
    %cst_64 = arith.constant dense<0.000000e+00> : vector<8x128xf32>
    %162 = tpu.matmul %160, %2, %cst_64 {dimension_numbers = #tpu.dot_dimension_numbers<[1], [0], [0], [1], [0, 0, 1, 1], [], []>} : vector<8x128xf32>, vector<128x128xf32>, vector<8x128xf32> -> vector<8x128xf32>
    %cst_65 = arith.constant dense<0.000000e+00> : vector<8x128xf32>
    %163 = tpu.matmul %159, %3, %cst_65 {dimension_numbers = #tpu.dot_dimension_numbers<[1], [0], [0], [1], [0, 0, 1, 1], [], []>} : vector<8x32xf32>, vector<32x128xf32>, vector<8x128xf32> -> vector<8x128xf32>
    %164 = arith.addf %162, %163 : vector<8x128xf32>
    %165 = arith.addf %164, %10 : vector<8x128xf32>
    %166 = arith.negf %165 : vector<8x128xf32>
    %167 = math.exp %166 : vector<8x128xf32>
    %cst_66 = arith.constant 1.000000e+00 : f32
    %168 = vector.broadcast %cst_66 : f32 to vector<8x128xf32>
    %169 = arith.addf %168, %167 : vector<8x128xf32>
    %170 = arith.divf %168, %169 : vector<8x128xf32>
    %171 = math.tanh %165 : vector<8x128xf32>
    %172 = vector.extract_strided_slice %170 {offsets = [0, 0], sizes = [8, 32], strides = [1, 1]} : vector<8x128xf32> to vector<8x32xf32>
    %c96_i32_67 = arith.constant 96 : i32
    %173 = tpu.dynamic_rotate %170 by %c96_i32_67 dim 1 : vector<8x128xf32>, i32 -> vector<8x128xf32>
    %174 = vector.extract_strided_slice %173 {offsets = [0, 0], sizes = [8, 32], strides = [1, 1]} : vector<8x128xf32> to vector<8x32xf32>
    %c64_i32_68 = arith.constant 64 : i32
    %175 = tpu.dynamic_rotate %171 by %c64_i32_68 dim 1 : vector<8x128xf32>, i32 -> vector<8x128xf32>
    %176 = vector.extract_strided_slice %175 {offsets = [0, 0], sizes = [8, 32], strides = [1, 1]} : vector<8x128xf32> to vector<8x32xf32>
    %c32_i32_69 = arith.constant 32 : i32
    %177 = tpu.dynamic_rotate %170 by %c32_i32_69 dim 1 : vector<8x128xf32>, i32 -> vector<8x128xf32>
    %178 = vector.extract_strided_slice %177 {offsets = [0, 0], sizes = [8, 32], strides = [1, 1]} : vector<8x128xf32> to vector<8x32xf32>
    %179 = arith.mulf %174, %157 : vector<8x32xf32>
    %180 = arith.mulf %172, %176 : vector<8x32xf32>
    %181 = arith.addf %179, %180 : vector<8x32xf32>
    %182 = math.tanh %181 : vector<8x32xf32>
    %183 = arith.mulf %178, %182 : vector<8x32xf32>
    %cst_70 = arith.constant dense<0.000000e+00> : vector<8x128xf32>
    %184 = tpu.matmul %183, %4, %cst_70 {dimension_numbers = #tpu.dot_dimension_numbers<[1], [0], [0], [1], [0, 0, 1, 1], [], []>} : vector<8x32xf32>, vector<32x128xf32>, vector<8x128xf32> -> vector<8x128xf32>
    %185 = arith.addf %184, %13 : vector<8x128xf32>
    %c0_71 = arith.constant 0 : index
    %c0_72 = arith.constant 0 : index
    %c0_73 = arith.constant 0 : index
    %186 = vector.load %arg10[%c0_71, %c0_72, %c0_73] : memref<5x8x128xf32, #tpu.memory_space<vmem>>, vector<1x8x128xf32>
    %187 = vector.shape_cast %186 : vector<1x8x128xf32> to vector<8x128xf32>
    %188 = vector.shape_cast %185 : vector<8x128xf32> to vector<1x8x128xf32>
    tpu.vector_store %arg10[%c0_71, %c0_72, %c0_73], %188 {strides = array<i32>} : memref<5x8x128xf32, #tpu.memory_space<vmem>>, vector<1x8x128xf32>,
    %cst_74 = arith.constant dense<0xFF800000> : vector<8xf32>
    %189 = vector.multi_reduction <maximumf>, %185, %cst_74 [1] : vector<8x128xf32> to vector<8xf32>
    %190 = vector.shape_cast %189 : vector<8xf32> to vector<8x1xf32>
    %191 = vector.broadcast %190 : vector<8x1xf32> to vector<8x128xf32>
    %192 = arith.cmpf oeq, %185, %191 : vector<8x128xf32>
    %c128_i32 = arith.constant 128 : i32
    %193 = vector.broadcast %c128_i32 : i32 to vector<8x128xi32>
    %194 = arith.select %192, %161, %193 : vector<8x128xi1>, vector<8x128xi32>
    %cst_75 = arith.constant dense<2147483647> : vector<8xi32>
    %195 = vector.multi_reduction <minsi>, %194, %cst_75 [1] : vector<8x128xi32> to vector<8xi32>
    %196 = vector.shape_cast %195 : vector<8xi32> to vector<8x1xi32>
    %197 = vector.broadcast %196 : vector<8x1xi32> to vector<8x128xi32>
    %198 = arith.cmpi eq, %161, %197 : vector<8x128xi32>
    %199 = arith.extui %198 : vector<8x128xi1> to vector<8x128xi32>
    %200 = arith.sitofp %199 : vector<8x128xi32> to vector<8x128xf32>
    %cst_76 = arith.constant dense<0.000000e+00> : vector<8x128xf32>
    %201 = tpu.matmul %200, %2, %cst_76 {dimension_numbers = #tpu.dot_dimension_numbers<[1], [0], [0], [1], [0, 0, 1, 1], [], []>} : vector<8x128xf32>, vector<128x128xf32>, vector<8x128xf32> -> vector<8x128xf32>
    %cst_77 = arith.constant dense<0.000000e+00> : vector<8x128xf32>
    %202 = tpu.matmul %183, %3, %cst_77 {dimension_numbers = #tpu.dot_dimension_numbers<[1], [0], [0], [1], [0, 0, 1, 1], [], []>} : vector<8x32xf32>, vector<32x128xf32>, vector<8x128xf32> -> vector<8x128xf32>
    %203 = arith.addf %201, %202 : vector<8x128xf32>
    %204 = arith.addf %203, %10 : vector<8x128xf32>
    %205 = arith.negf %204 : vector<8x128xf32>
    %206 = math.exp %205 : vector<8x128xf32>
    %cst_78 = arith.constant 1.000000e+00 : f32
    %207 = vector.broadcast %cst_78 : f32 to vector<8x128xf32>
    %208 = arith.addf %207, %206 : vector<8x128xf32>
    %209 = arith.divf %207, %208 : vector<8x128xf32>
    %210 = math.tanh %204 : vector<8x128xf32>
    %211 = vector.extract_strided_slice %209 {offsets = [0, 0], sizes = [8, 32], strides = [1, 1]} : vector<8x128xf32> to vector<8x32xf32>
    %c96_i32_79 = arith.constant 96 : i32
    %212 = tpu.dynamic_rotate %209 by %c96_i32_79 dim 1 : vector<8x128xf32>, i32 -> vector<8x128xf32>
    %213 = vector.extract_strided_slice %212 {offsets = [0, 0], sizes = [8, 32], strides = [1, 1]} : vector<8x128xf32> to vector<8x32xf32>
    %c64_i32_80 = arith.constant 64 : i32
    %214 = tpu.dynamic_rotate %210 by %c64_i32_80 dim 1 : vector<8x128xf32>, i32 -> vector<8x128xf32>
    %215 = vector.extract_strided_slice %214 {offsets = [0, 0], sizes = [8, 32], strides = [1, 1]} : vector<8x128xf32> to vector<8x32xf32>
    %c32_i32_81 = arith.constant 32 : i32
    %216 = tpu.dynamic_rotate %209 by %c32_i32_81 dim 1 : vector<8x128xf32>, i32 -> vector<8x128xf32>
    %217 = vector.extract_strided_slice %216 {offsets = [0, 0], sizes = [8, 32], strides = [1, 1]} : vector<8x128xf32> to vector<8x32xf32>
    %218 = arith.mulf %213, %181 : vector<8x32xf32>
    %219 = arith.mulf %211, %215 : vector<8x32xf32>
    %220 = arith.addf %218, %219 : vector<8x32xf32>
    %221 = math.tanh %220 : vector<8x32xf32>
    %222 = arith.mulf %217, %221 : vector<8x32xf32>
    %cst_82 = arith.constant dense<0.000000e+00> : vector<8x128xf32>
    %223 = tpu.matmul %222, %4, %cst_82 {dimension_numbers = #tpu.dot_dimension_numbers<[1], [0], [0], [1], [0, 0, 1, 1], [], []>} : vector<8x32xf32>, vector<32x128xf32>, vector<8x128xf32> -> vector<8x128xf32>
    %224 = arith.addf %223, %13 : vector<8x128xf32>
    %c1_83 = arith.constant 1 : index
    %c0_84 = arith.constant 0 : index
    %c0_85 = arith.constant 0 : index
    %225 = vector.load %arg10[%c1_83, %c0_84, %c0_85] : memref<5x8x128xf32, #tpu.memory_space<vmem>>, vector<1x8x128xf32>
    %226 = vector.shape_cast %225 : vector<1x8x128xf32> to vector<8x128xf32>
    %227 = vector.shape_cast %224 : vector<8x128xf32> to vector<1x8x128xf32>
    tpu.vector_store %arg10[%c1_83, %c0_84, %c0_85], %227 {strides = array<i32>} : memref<5x8x128xf32, #tpu.memory_space<vmem>>, vector<1x8x128xf32>,
    %cst_86 = arith.constant dense<0xFF800000> : vector<8xf32>
    %228 = vector.multi_reduction <maximumf>, %224, %cst_86 [1] : vector<8x128xf32> to vector<8xf32>
    %229 = vector.shape_cast %228 : vector<8xf32> to vector<8x1xf32>
    %230 = vector.broadcast %229 : vector<8x1xf32> to vector<8x128xf32>
    %231 = arith.cmpf oeq, %224, %230 : vector<8x128xf32>
    %c128_i32_87 = arith.constant 128 : i32
    %232 = vector.broadcast %c128_i32_87 : i32 to vector<8x128xi32>
    %233 = arith.select %231, %161, %232 : vector<8x128xi1>, vector<8x128xi32>
    %cst_88 = arith.constant dense<2147483647> : vector<8xi32>
    %234 = vector.multi_reduction <minsi>, %233, %cst_88 [1] : vector<8x128xi32> to vector<8xi32>
    %235 = vector.shape_cast %234 : vector<8xi32> to vector<8x1xi32>
    %236 = vector.broadcast %235 : vector<8x1xi32> to vector<8x128xi32>
    %237 = arith.cmpi eq, %161, %236 : vector<8x128xi32>
    %238 = arith.extui %237 : vector<8x128xi1> to vector<8x128xi32>
    %239 = arith.sitofp %238 : vector<8x128xi32> to vector<8x128xf32>
    %cst_89 = arith.constant dense<0.000000e+00> : vector<8x128xf32>
    %240 = tpu.matmul %239, %2, %cst_89 {dimension_numbers = #tpu.dot_dimension_numbers<[1], [0], [0], [1], [0, 0, 1, 1], [], []>} : vector<8x128xf32>, vector<128x128xf32>, vector<8x128xf32> -> vector<8x128xf32>
    %cst_90 = arith.constant dense<0.000000e+00> : vector<8x128xf32>
    %241 = tpu.matmul %222, %3, %cst_90 {dimension_numbers = #tpu.dot_dimension_numbers<[1], [0], [0], [1], [0, 0, 1, 1], [], []>} : vector<8x32xf32>, vector<32x128xf32>, vector<8x128xf32> -> vector<8x128xf32>
    %242 = arith.addf %240, %241 : vector<8x128xf32>
    %243 = arith.addf %242, %10 : vector<8x128xf32>
    %244 = arith.negf %243 : vector<8x128xf32>
    %245 = math.exp %244 : vector<8x128xf32>
    %cst_91 = arith.constant 1.000000e+00 : f32
    %246 = vector.broadcast %cst_91 : f32 to vector<8x128xf32>
    %247 = arith.addf %246, %245 : vector<8x128xf32>
    %248 = arith.divf %246, %247 : vector<8x128xf32>
    %249 = math.tanh %243 : vector<8x128xf32>
    %250 = vector.extract_strided_slice %248 {offsets = [0, 0], sizes = [8, 32], strides = [1, 1]} : vector<8x128xf32> to vector<8x32xf32>
    %c96_i32_92 = arith.constant 96 : i32
    %251 = tpu.dynamic_rotate %248 by %c96_i32_92 dim 1 : vector<8x128xf32>, i32 -> vector<8x128xf32>
    %252 = vector.extract_strided_slice %251 {offsets = [0, 0], sizes = [8, 32], strides = [1, 1]} : vector<8x128xf32> to vector<8x32xf32>
    %c64_i32_93 = arith.constant 64 : i32
    %253 = tpu.dynamic_rotate %249 by %c64_i32_93 dim 1 : vector<8x128xf32>, i32 -> vector<8x128xf32>
    %254 = vector.extract_strided_slice %253 {offsets = [0, 0], sizes = [8, 32], strides = [1, 1]} : vector<8x128xf32> to vector<8x32xf32>
    %c32_i32_94 = arith.constant 32 : i32
    %255 = tpu.dynamic_rotate %248 by %c32_i32_94 dim 1 : vector<8x128xf32>, i32 -> vector<8x128xf32>
    %256 = vector.extract_strided_slice %255 {offsets = [0, 0], sizes = [8, 32], strides = [1, 1]} : vector<8x128xf32> to vector<8x32xf32>
    %257 = arith.mulf %252, %220 : vector<8x32xf32>
    %258 = arith.mulf %250, %254 : vector<8x32xf32>
    %259 = arith.addf %257, %258 : vector<8x32xf32>
    %260 = math.tanh %259 : vector<8x32xf32>
    %261 = arith.mulf %256, %260 : vector<8x32xf32>
    %cst_95 = arith.constant dense<0.000000e+00> : vector<8x128xf32>
    %262 = tpu.matmul %261, %4, %cst_95 {dimension_numbers = #tpu.dot_dimension_numbers<[1], [0], [0], [1], [0, 0, 1, 1], [], []>} : vector<8x32xf32>, vector<32x128xf32>, vector<8x128xf32> -> vector<8x128xf32>
    %263 = arith.addf %262, %13 : vector<8x128xf32>
    %c2_96 = arith.constant 2 : index
    %c0_97 = arith.constant 0 : index
    %c0_98 = arith.constant 0 : index
    %264 = vector.load %arg10[%c2_96, %c0_97, %c0_98] : memref<5x8x128xf32, #tpu.memory_space<vmem>>, vector<1x8x128xf32>
    %265 = vector.shape_cast %264 : vector<1x8x128xf32> to vector<8x128xf32>
    %266 = vector.shape_cast %263 : vector<8x128xf32> to vector<1x8x128xf32>
    tpu.vector_store %arg10[%c2_96, %c0_97, %c0_98], %266 {strides = array<i32>} : memref<5x8x128xf32, #tpu.memory_space<vmem>>, vector<1x8x128xf32>,
    %cst_99 = arith.constant dense<0xFF800000> : vector<8xf32>
    %267 = vector.multi_reduction <maximumf>, %263, %cst_99 [1] : vector<8x128xf32> to vector<8xf32>
    %268 = vector.shape_cast %267 : vector<8xf32> to vector<8x1xf32>
    %269 = vector.broadcast %268 : vector<8x1xf32> to vector<8x128xf32>
    %270 = arith.cmpf oeq, %263, %269 : vector<8x128xf32>
    %c128_i32_100 = arith.constant 128 : i32
    %271 = vector.broadcast %c128_i32_100 : i32 to vector<8x128xi32>
    %272 = arith.select %270, %161, %271 : vector<8x128xi1>, vector<8x128xi32>
    %cst_101 = arith.constant dense<2147483647> : vector<8xi32>
    %273 = vector.multi_reduction <minsi>, %272, %cst_101 [1] : vector<8x128xi32> to vector<8xi32>
    %274 = vector.shape_cast %273 : vector<8xi32> to vector<8x1xi32>
    %275 = vector.broadcast %274 : vector<8x1xi32> to vector<8x128xi32>
    %276 = arith.cmpi eq, %161, %275 : vector<8x128xi32>
    %277 = arith.extui %276 : vector<8x128xi1> to vector<8x128xi32>
    %278 = arith.sitofp %277 : vector<8x128xi32> to vector<8x128xf32>
    %cst_102 = arith.constant dense<0.000000e+00> : vector<8x128xf32>
    %279 = tpu.matmul %278, %2, %cst_102 {dimension_numbers = #tpu.dot_dimension_numbers<[1], [0], [0], [1], [0, 0, 1, 1], [], []>} : vector<8x128xf32>, vector<128x128xf32>, vector<8x128xf32> -> vector<8x128xf32>
    %cst_103 = arith.constant dense<0.000000e+00> : vector<8x128xf32>
    %280 = tpu.matmul %261, %3, %cst_103 {dimension_numbers = #tpu.dot_dimension_numbers<[1], [0], [0], [1], [0, 0, 1, 1], [], []>} : vector<8x32xf32>, vector<32x128xf32>, vector<8x128xf32> -> vector<8x128xf32>
    %281 = arith.addf %279, %280 : vector<8x128xf32>
    %282 = arith.addf %281, %10 : vector<8x128xf32>
    %283 = arith.negf %282 : vector<8x128xf32>
    %284 = math.exp %283 : vector<8x128xf32>
    %cst_104 = arith.constant 1.000000e+00 : f32
    %285 = vector.broadcast %cst_104 : f32 to vector<8x128xf32>
    %286 = arith.addf %285, %284 : vector<8x128xf32>
    %287 = arith.divf %285, %286 : vector<8x128xf32>
    %288 = math.tanh %282 : vector<8x128xf32>
    %289 = vector.extract_strided_slice %287 {offsets = [0, 0], sizes = [8, 32], strides = [1, 1]} : vector<8x128xf32> to vector<8x32xf32>
    %c96_i32_105 = arith.constant 96 : i32
    %290 = tpu.dynamic_rotate %287 by %c96_i32_105 dim 1 : vector<8x128xf32>, i32 -> vector<8x128xf32>
    %291 = vector.extract_strided_slice %290 {offsets = [0, 0], sizes = [8, 32], strides = [1, 1]} : vector<8x128xf32> to vector<8x32xf32>
    %c64_i32_106 = arith.constant 64 : i32
    %292 = tpu.dynamic_rotate %288 by %c64_i32_106 dim 1 : vector<8x128xf32>, i32 -> vector<8x128xf32>
    %293 = vector.extract_strided_slice %292 {offsets = [0, 0], sizes = [8, 32], strides = [1, 1]} : vector<8x128xf32> to vector<8x32xf32>
    %c32_i32_107 = arith.constant 32 : i32
    %294 = tpu.dynamic_rotate %287 by %c32_i32_107 dim 1 : vector<8x128xf32>, i32 -> vector<8x128xf32>
    %295 = vector.extract_strided_slice %294 {offsets = [0, 0], sizes = [8, 32], strides = [1, 1]} : vector<8x128xf32> to vector<8x32xf32>
    %296 = arith.mulf %291, %259 : vector<8x32xf32>
    %297 = arith.mulf %289, %293 : vector<8x32xf32>
    %298 = arith.addf %296, %297 : vector<8x32xf32>
    %299 = math.tanh %298 : vector<8x32xf32>
    %300 = arith.mulf %295, %299 : vector<8x32xf32>
    %cst_108 = arith.constant dense<0.000000e+00> : vector<8x128xf32>
    %301 = tpu.matmul %300, %4, %cst_108 {dimension_numbers = #tpu.dot_dimension_numbers<[1], [0], [0], [1], [0, 0, 1, 1], [], []>} : vector<8x32xf32>, vector<32x128xf32>, vector<8x128xf32> -> vector<8x128xf32>
    %302 = arith.addf %301, %13 : vector<8x128xf32>
    %c3_109 = arith.constant 3 : index
    %c0_110 = arith.constant 0 : index
    %c0_111 = arith.constant 0 : index
    %303 = vector.load %arg10[%c3_109, %c0_110, %c0_111] : memref<5x8x128xf32, #tpu.memory_space<vmem>>, vector<1x8x128xf32>
    %304 = vector.shape_cast %303 : vector<1x8x128xf32> to vector<8x128xf32>
    %305 = vector.shape_cast %302 : vector<8x128xf32> to vector<1x8x128xf32>
    tpu.vector_store %arg10[%c3_109, %c0_110, %c0_111], %305 {strides = array<i32>} : memref<5x8x128xf32, #tpu.memory_space<vmem>>, vector<1x8x128xf32>,
    %cst_112 = arith.constant dense<0xFF800000> : vector<8xf32>
    %306 = vector.multi_reduction <maximumf>, %302, %cst_112 [1] : vector<8x128xf32> to vector<8xf32>
    %307 = vector.shape_cast %306 : vector<8xf32> to vector<8x1xf32>
    %308 = vector.broadcast %307 : vector<8x1xf32> to vector<8x128xf32>
    %309 = arith.cmpf oeq, %302, %308 : vector<8x128xf32>
    %c128_i32_113 = arith.constant 128 : i32
    %310 = vector.broadcast %c128_i32_113 : i32 to vector<8x128xi32>
    %311 = arith.select %309, %161, %310 : vector<8x128xi1>, vector<8x128xi32>
    %cst_114 = arith.constant dense<2147483647> : vector<8xi32>
    %312 = vector.multi_reduction <minsi>, %311, %cst_114 [1] : vector<8x128xi32> to vector<8xi32>
    %313 = vector.shape_cast %312 : vector<8xi32> to vector<8x1xi32>
    %314 = vector.broadcast %313 : vector<8x1xi32> to vector<8x128xi32>
    %315 = arith.cmpi eq, %161, %314 : vector<8x128xi32>
    %316 = arith.extui %315 : vector<8x128xi1> to vector<8x128xi32>
    %317 = arith.sitofp %316 : vector<8x128xi32> to vector<8x128xf32>
    %cst_115 = arith.constant dense<0.000000e+00> : vector<8x128xf32>
    %318 = tpu.matmul %317, %2, %cst_115 {dimension_numbers = #tpu.dot_dimension_numbers<[1], [0], [0], [1], [0, 0, 1, 1], [], []>} : vector<8x128xf32>, vector<128x128xf32>, vector<8x128xf32> -> vector<8x128xf32>
    %cst_116 = arith.constant dense<0.000000e+00> : vector<8x128xf32>
    %319 = tpu.matmul %300, %3, %cst_116 {dimension_numbers = #tpu.dot_dimension_numbers<[1], [0], [0], [1], [0, 0, 1, 1], [], []>} : vector<8x32xf32>, vector<32x128xf32>, vector<8x128xf32> -> vector<8x128xf32>
    %320 = arith.addf %318, %319 : vector<8x128xf32>
    %321 = arith.addf %320, %10 : vector<8x128xf32>
    %322 = arith.negf %321 : vector<8x128xf32>
    %323 = math.exp %322 : vector<8x128xf32>
    %cst_117 = arith.constant 1.000000e+00 : f32
    %324 = vector.broadcast %cst_117 : f32 to vector<8x128xf32>
    %325 = arith.addf %324, %323 : vector<8x128xf32>
    %326 = arith.divf %324, %325 : vector<8x128xf32>
    %327 = math.tanh %321 : vector<8x128xf32>
    %328 = vector.extract_strided_slice %326 {offsets = [0, 0], sizes = [8, 32], strides = [1, 1]} : vector<8x128xf32> to vector<8x32xf32>
    %c96_i32_118 = arith.constant 96 : i32
    %329 = tpu.dynamic_rotate %326 by %c96_i32_118 dim 1 : vector<8x128xf32>, i32 -> vector<8x128xf32>
    %330 = vector.extract_strided_slice %329 {offsets = [0, 0], sizes = [8, 32], strides = [1, 1]} : vector<8x128xf32> to vector<8x32xf32>
    %c64_i32_119 = arith.constant 64 : i32
    %331 = tpu.dynamic_rotate %327 by %c64_i32_119 dim 1 : vector<8x128xf32>, i32 -> vector<8x128xf32>
    %332 = vector.extract_strided_slice %331 {offsets = [0, 0], sizes = [8, 32], strides = [1, 1]} : vector<8x128xf32> to vector<8x32xf32>
    %c32_i32_120 = arith.constant 32 : i32
    %333 = tpu.dynamic_rotate %326 by %c32_i32_120 dim 1 : vector<8x128xf32>, i32 -> vector<8x128xf32>
    %334 = vector.extract_strided_slice %333 {offsets = [0, 0], sizes = [8, 32], strides = [1, 1]} : vector<8x128xf32> to vector<8x32xf32>
    %335 = arith.mulf %330, %298 : vector<8x32xf32>
    %336 = arith.mulf %328, %332 : vector<8x32xf32>
    %337 = arith.addf %335, %336 : vector<8x32xf32>
    %338 = math.tanh %337 : vector<8x32xf32>
    %339 = arith.mulf %334, %338 : vector<8x32xf32>
    %cst_121 = arith.constant dense<0.000000e+00> : vector<8x128xf32>
    %340 = tpu.matmul %339, %4, %cst_121 {dimension_numbers = #tpu.dot_dimension_numbers<[1], [0], [0], [1], [0, 0, 1, 1], [], []>} : vector<8x32xf32>, vector<32x128xf32>, vector<8x128xf32> -> vector<8x128xf32>
    %341 = arith.addf %340, %13 : vector<8x128xf32>
    %c4_122 = arith.constant 4 : index
    %c0_123 = arith.constant 0 : index
    %c0_124 = arith.constant 0 : index
    %342 = vector.load %arg10[%c4_122, %c0_123, %c0_124] : memref<5x8x128xf32, #tpu.memory_space<vmem>>, vector<1x8x128xf32>
    %343 = vector.shape_cast %342 : vector<1x8x128xf32> to vector<8x128xf32>
    %344 = vector.shape_cast %341 : vector<8x128xf32> to vector<1x8x128xf32>
    tpu.vector_store %arg10[%c4_122, %c0_123, %c0_124], %344 {strides = array<i32>} : memref<5x8x128xf32, #tpu.memory_space<vmem>>, vector<1x8x128xf32>,
    return
  }
}

</mosaic_0001>

<llo_original>
// kernel: _seq2seq_forward_jit.1
$region0: #{_seq2seq_forward_jit.1}
  #allocation0 [shape = 'u32[]', space=smem, size = 0x4, offset = 0x4, fixed_abs, tag = 'smem constant byte address 0x4 - core index']
  #allocation1 [shape = 'u32[72,128]{1,0:T(1,128)}', space=vmem, size = 0x9000, scoped, tag = 'internal scratch']
  %s0 = inlined_call_operand.vmem [shape: f32[6,8,8], index: 0, kind: input, shape index: {}]
  %s1 = inlined_call_operand.vmem [shape: f32[8,128], index: 1, kind: input, shape index: {}]
  %s2 = inlined_call_operand.vmem [shape: f32[8,128], index: 2, kind: input, shape index: {}]
  %s3 = inlined_call_operand.vmem [shape: f32[32,128], index: 3, kind: input, shape index: {}]
  %s4 = inlined_call_operand.vmem [shape: f32[1,128], index: 4, kind: input, shape index: {}]
  %s5 = inlined_call_operand.hbm [shape: f32[128,128], index: 5, kind: input, shape index: {}]
  %s6 = inlined_call_operand.hbm [shape: f32[32,128], index: 6, kind: input, shape index: {}]
  %s7 = inlined_call_operand.vmem [shape: f32[1,128], index: 7, kind: input, shape index: {}]
  %s8 = inlined_call_operand.hbm [shape: f32[32,128], index: 8, kind: input, shape index: {}]
  %s9 = inlined_call_operand.vmem [shape: f32[1,128], index: 9, kind: input, shape index: {}]
  %s10 = inlined_call_operand.vmem [shape: f32[5,8,128], index: 10, kind: output, shape index: {}]
  %s11 = sld [smem:[#allocation0]]
  $region62: #{_seq2seq_forward_jit.1} parent=0
    _
  %s13 = ssub.s32 1, %s11
  %s14 = scalar_select 0, %s13, %s11
  $region1: #{_seq2seq_forward_jit.1} parent=0
    #allocation2 [shape = 'u8[65536]{0}', space=vmem, size = 0x10000, scoped, tag = 'input window, operand 5, single buffered']
    #allocation3 [shape = 's32[1]{0}', space=sflag, size = 0x4, scoped, tag = 'scoped memory for _seq2seq_forward_jit.1']
    #allocation4 [shape = 'u8[16384]{0}', space=vmem, size = 0x4000, scoped, tag = 'input window, operand 6, single buffered']
    #allocation5 [shape = 's32[1]{0}', space=sflag, size = 0x4, scoped, tag = 'scoped memory for _seq2seq_forward_jit.1']
    #allocation6 [shape = 'u8[16384]{0}', space=vmem, size = 0x4000, scoped, tag = 'input window, operand 8, single buffered']
    %15 = vsyncpa [#allocation3], 0
    %16 = vsyncpa [#allocation5], 0
    // Predicated region
    $region2: #{_seq2seq_forward_jit.1} parent=1 // pred_check
      _
    $region3: #{_seq2seq_forward_jit.1} parent=1 // pred_check_branch
      %18 = sbr.rel (0) target = $region5
    $region4: #{_seq2seq_forward_jit.1} parent=1 // pred_region
      _
    $region5: #{_seq2seq_forward_jit.1} parent=1 // pred_fallthru
      _
    // Predicated region
    $region6: #{_seq2seq_forward_jit.1} parent=1 // pred_check
      _
    $region7: #{_seq2seq_forward_jit.1} parent=1 // pred_check_branch
      %20 = sbr.rel (0) target = $region9
    $region8: #{_seq2seq_forward_jit.1} parent=1 // pred_region
      _
    $region9: #{_seq2seq_forward_jit.1} parent=1 // pred_fallthru
      _
    // Predicated region
    $region10: #{_seq2seq_forward_jit.1} parent=1 // pred_check
      _
    $region11: #{_seq2seq_forward_jit.1} parent=1 // pred_check_branch
      %22 = sbr.rel (0) target = $region13
    $region12: #{_seq2seq_forward_jit.1} parent=1 // pred_region
      _
    $region13: #{_seq2seq_forward_jit.1} parent=1 // pred_fallthru
      _
    // Predicated region
    $region14: #{_seq2seq_forward_jit.1} parent=1 // pred_check
      _
    $region15: #{_seq2seq_forward_jit.1} parent=1 // pred_check_branch
      %24 = sbr.rel (0) target = $region17
    $region16: #{_seq2seq_forward_jit.1} parent=1 // pred_region
      _
    $region17: #{_seq2seq_forward_jit.1} parent=1 // pred_fallthru
      _
    // Predicated region
    $region18: #{_seq2seq_forward_jit.1} parent=1 // pred_check
      _
    $region19: #{_seq2seq_forward_jit.1} parent=1 // pred_check_branch
      %26 = sbr.rel (0) target = $region21
    $region20: #{_seq2seq_forward_jit.1} parent=1 // pred_region
      _
    $region21: #{_seq2seq_forward_jit.1} parent=1 // pred_fallthru
      _
    // Predicated region
    $region22: #{_seq2seq_forward_jit.1} parent=1 // pred_check
      _
    $region23: #{_seq2seq_forward_jit.1} parent=1 // pred_check_branch
      %28 = sbr.rel (0) target = $region25
    $region24: #{_seq2seq_forward_jit.1} parent=1 // pred_region
      %30 = vsyncadd [#allocation3], 0
      %s31 = sshll.u32 %s5, 4
      %s32 = int_to_ptr.hbm [resolvable:$true] %s31
      %s33 = sshll.u32 [#allocation2], 4
      %s34 = int_to_ptr.vmem [resolvable:$true] %s33
      %39 = dma.hbm_to_vmem [thread:$0]  %s32, 2048, %s34, [#allocation3], 128, 128, 8
    $region25: #{_seq2seq_forward_jit.1} parent=1 // pred_fallthru
      _
    // Predicated region
    $region26: #{_seq2seq_forward_jit.1} parent=1 // pred_check
      _
    $region27: #{_seq2seq_forward_jit.1} parent=1 // pred_check_branch
      %41 = sbr.rel (0) target = $region29
    $region28: #{_seq2seq_forward_jit.1} parent=1 // pred_region
      %43 = vsyncadd [#allocation5], 0
      %s44 = sshll.u32 %s6, 4
      %s45 = int_to_ptr.hbm [resolvable:$true] %s44
      %s46 = sshll.u32 [#allocation4], 4
      %s47 = int_to_ptr.vmem [resolvable:$true] %s46
      %52 = dma.hbm_to_vmem [thread:$0]  %s45, 512, %s47, [#allocation5], 128, 128, 8
    $region29: #{_seq2seq_forward_jit.1} parent=1 // pred_fallthru
      _
    // Predicated region
    $region30: #{_seq2seq_forward_jit.1} parent=1 // pred_check
      _
    $region31: #{_seq2seq_forward_jit.1} parent=1 // pred_check_branch
      %54 = sbr.rel (0) target = $region33
    $region32: #{_seq2seq_forward_jit.1} parent=1 // pred_region
      _
    $region33: #{_seq2seq_forward_jit.1} parent=1 // pred_fallthru
      _
    // Predicated region
    $region34: #{_seq2seq_forward_jit.1} parent=1 // pred_check
      _
    $region35: #{_seq2seq_forward_jit.1} parent=1 // pred_check_branch
      %56 = sbr.rel (0) target = $region37
    $region36: #{_seq2seq_forward_jit.1} parent=1 // pred_region
      %58 = vsyncadd [#allocation5], 0
      %s59 = sshll.u32 %s8, 4
      %s60 = int_to_ptr.hbm [resolvable:$true] %s59
      %s61 = sshll.u32 [#allocation6], 4
      %s62 = int_to_ptr.vmem [resolvable:$true] %s61
      %67 = dma.hbm_to_vmem [thread:$0]  %s60, 512, %s62, [#allocation5], 128, 128, 8
    $region37: #{_seq2seq_forward_jit.1} parent=1 // pred_fallthru
      _
    // Predicated region
    $region38: #{_seq2seq_forward_jit.1} parent=1 // pred_check
      _
    $region39: #{_seq2seq_forward_jit.1} parent=1 // pred_check_branch
      %69 = sbr.rel (0) target = $region41
    $region40: #{_seq2seq_forward_jit.1} parent=1 // pred_region
      _
    $region41: #{_seq2seq_forward_jit.1} parent=1 // pred_fallthru
      _
    // Predicated region
    $region42: #{_seq2seq_forward_jit.1} parent=1 // pred_check
      _
    $region43: #{_seq2seq_forward_jit.1} parent=1 // pred_check_branch
      %71 = sbr.rel (0) target = $region45
    $region44: #{_seq2seq_forward_jit.1} parent=1 // pred_region
      %73 = dma.done [#allocation3], 2048
    $region45: #{_seq2seq_forward_jit.1} parent=1 // pred_fallthru
      _
    // Predicated region
    $region46: #{_seq2seq_forward_jit.1} parent=1 // pred_check
      _
    $region47: #{_seq2seq_forward_jit.1} parent=1 // pred_check_branch
      %75 = sbr.rel (0) target = $region49
    $region48: #{_seq2seq_forward_jit.1} parent=1 // pred_region
      %77 = dma.done [#allocation5], 512
    $region49: #{_seq2seq_forward_jit.1} parent=1 // pred_fallthru
      _
    // Predicated region
    $region50: #{_seq2seq_forward_jit.1} parent=1 // pred_check
      _
    $region51: #{_seq2seq_forward_jit.1} parent=1 // pred_check_branch
      %79 = sbr.rel (0) target = $region53
    $region52: #{_seq2seq_forward_jit.1} parent=1 // pred_region
      %81 = dma.done [#allocation5], 512
    $region53: #{_seq2seq_forward_jit.1} parent=1 // pred_fallthru
      _
    %v82 = vld [vmem:[%s2] sm:$0xff]
    %v83 = vld [vmem:[%s3] sm:$0xff]
    %v84 = vld [vmem:[%s3 + $0x8] sm:$0xff]
    %v85 = vld [vmem:[%s3 + $0x10] sm:$0xff]
    %v86 = vld [vmem:[%s3 + $0x18] sm:$0xff]
    %v87 = vld [vmem:[#allocation2] sm:$0xff]
    %v88 = vld [vmem:[#allocation2 + $0x8] sm:$0xff]
    %v89 = vld [vmem:[#allocation2 + $0x10] sm:$0xff]
    %v90 = vld [vmem:[#allocation2 + $0x18] sm:$0xff]
    %v91 = vld [vmem:[#allocation2 + $0x20] sm:$0xff]
    %v92 = vld [vmem:[#allocation2 + $0x28] sm:$0xff]
    %v93 = vld [vmem:[#allocation2 + $0x30] sm:$0xff]
    %v94 = vld [vmem:[#allocation2 + $0x38] sm:$0xff]
    %v95 = vld [vmem:[#allocation2 + $0x40] sm:$0xff]
    %v96 = vld [vmem:[#allocation2 + $0x48] sm:$0xff]
    %v97 = vld [vmem:[#allocation2 + $0x50] sm:$0xff]
    %v98 = vld [vmem:[#allocation2 + $0x58] sm:$0xff]
    %v99 = vld [vmem:[#allocation2 + $0x60] sm:$0xff]
    %v100 = vld [vmem:[#allocation2 + $0x68] sm:$0xff]
    %v101 = vld [vmem:[#allocation2 + $0x70] sm:$0xff]
    %v102 = vld [vmem:[#allocation2 + $0x78] sm:$0xff]
    %v103 = vld [vmem:[#allocation4] sm:$0xff]
    %v104 = vld [vmem:[#allocation4 + $0x8] sm:$0xff]
    %v105 = vld [vmem:[#allocation4 + $0x10] sm:$0xff]
    %v106 = vld [vmem:[#allocation4 + $0x18] sm:$0xff]
    %v107 = vld [vmem:[#allocation6] sm:$0xff]
    %v108 = vld [vmem:[#allocation6 + $0x8] sm:$0xff]
    %v109 = vld [vmem:[#allocation6 + $0x10] sm:$0xff]
    %v110 = vld [vmem:[#allocation6 + $0x18] sm:$0xff]
    %v111 = vld [vmem:[%s4] sm:$0x1]
    %v113 = vperm.slane %v111, 0
    %v115 = vld [vmem:[%s7] sm:$0x1]
    %v117 = vperm.slane %v115, 0
    %v119 = vld [vmem:[%s9] sm:$0x1]
    %v121 = vperm.slane %v119, 0
    %v123 = vld [vmem:[%s0] sm:$0xff]
    %vm124 = vcmask 261120
    %v126 = vsel %vm124, 0.0, 0
    %128 = vmatpush.msra.mxu0 0.0
    %129 = vmatpush.msra.mxu0 0.0
    %130 = vmatpush.msra.mxu0 0.0
    %131 = vmatpush.msra.mxu0 0.0
    %132 = vmatpush.msra.mxu0 0.0
    %133 = vmatpush.msra.mxu0 0.0
    %134 = vmatpush.msra.mxu0 0.0
    %135 = vmatpush.msra.mxu0 0.0
    %136 = vmatpush.msra.mxu0 0.0
    %137 = vmatpush.msra.mxu0 0.0
    %138 = vmatpush.msra.mxu0 0.0
    %139 = vmatpush.msra.mxu0 0.0
    %140 = vmatpush.msra.mxu0 %v86
    %141 = vmatpush.msra.mxu0 %v85
    %142 = vmatpush.msra.mxu0 %v84
    %143 = vmatpush.msra.mxu0 %v83
    %144 = vmatmul.f32.gmra.mxu0 %v126
    %v145 = vpop.f32.mrf.mxu0
    %v146 = vadd.f32 0.0, %v145
    %147 = vdwg.mxu0
    %vm148 = vcmask 64512
    %v150 = vsel %vm148, %v123, 0
    %152 = vmatpush.msra.mxu0 0.0
    %153 = vmatpush.msra.mxu0 0.0
    %154 = vmatpush.msra.mxu0 0.0
    %155 = vmatpush.msra.mxu0 0.0
    %156 = vmatpush.msra.mxu0 0.0
    %157 = vmatpush.msra.mxu0 0.0
    %158 = vmatpush.msra.mxu0 0.0
    %159 = vmatpush.msra.mxu0 0.0
    %160 = vmatpush.msra.mxu0 0.0
    %161 = vmatpush.msra.mxu0 0.0
    %162 = vmatpush.msra.mxu0 0.0
    %163 = vmatpush.msra.mxu0 0.0
    %164 = vmatpush.msra.mxu0 0.0
    %165 = vmatpush.msra.mxu0 0.0
    %166 = vmatpush.msra.mxu0 0.0
    %167 = vmatpush.msra.mxu0 %v82
    %168 = vmatmul.f32.gmra.mxu0 %v150
    %v169 = vpop.f32.mrf.mxu0
    %v170 = vadd.f32 %v146, %v169
    %171 = vdwg.mxu0
    %v172 = vadd.f32 %v170, %v113
    %v173 = vxor.u32 %v172, 2147483648
    %v174 = vmul.f32 %v173, 1.442695
    %v175 = vpow.pop %v174
    %v176 = vadd.f32 %v175, 1.0
    %v177 = vrcp.pop %v176
    %v178 = vmul.f32 %v176, %v177
    %v179 = vsub.f32 1.0, %v178
    %v180 = vmul.f32 %v177, %v179
    %v181 = vadd.f32 %v177, %v180
    %vm182 = vweird.f32 %v176
    %vm183 = vweird.f32 %v177
    %vm184 = vmor %vm182, %vm183
    %v185 = vsel %vm184, %v177, %v181
    %v186 = vand.u32 2147483647, %v176
    %vm187 = vcmp.eq.f32.partialorder %v186, 8.507059e+37
    %v188 = vand.u32 %v176, 2147483648
    %v189 = vor.u32 1.1754944e-38, %v188
    %v190 = vsel %vm187, %v189, %v185
    %v191 = vmul.f32 1.0, %v190
    %v192 = vtanh.pop %v172
    %193 = vrot.lane.b32.xlu0 %v191, 96
    %v194 = vpop.permute.xlu0 %193
    %195 = vrot.lane.b32.xlu0 %v192, 64
    %v196 = vpop.permute.xlu0 %195
    %197 = vrot.lane.b32.xlu0 %v191, 32
    %v198 = vpop.permute.xlu0 %197
    %v199 = vmul.f32 %v194, 0.0
    %v200 = vmul.f32 %v191, %v196
    %v201 = vadd.f32 %v199, %v200
    %v202 = vtanh.pop %v201
    %v203 = vmul.f32 %v198, %v202
    %s204 = scalar_lea.vmem %s0, 8
    %v205 = vld [vmem:[%s204] sm:$0xff]
    %v207 = vsel %vm124, %v203, 0
    %209 = vmatpush.msra.mxu0 0.0
    %210 = vmatpush.msra.mxu0 0.0
    %211 = vmatpush.msra.mxu0 0.0
    %212 = vmatpush.msra.mxu0 0.0
    %213 = vmatpush.msra.mxu0 0.0
    %214 = vmatpush.msra.mxu0 0.0
    %215 = vmatpush.msra.mxu0 0.0
    %216 = vmatpush.msra.mxu0 0.0
    %217 = vmatpush.msra.mxu0 0.0
    %218 = vmatpush.msra.mxu0 0.0
    %219 = vmatpush.msra.mxu0 0.0
    %220 = vmatpush.msra.mxu0 0.0
    %221 = vmatpush.msra.mxu0 %v86
    %222 = vmatpush.msra.mxu0 %v85
    %223 = vmatpush.msra.mxu0 %v84
    %224 = vmatpush.msra.mxu0 %v83
    %225 = vmatmul.f32.gmra.mxu0 %v207
    %v226 = vpop.f32.mrf.mxu0
    %v227 = vadd.f32 0.0, %v226
    %228 = vdwg.mxu0
    %v230 = vsel %vm148, %v205, 0
    %232 = vmatpush.msra.mxu0 0.0
    %233 = vmatpush.msra.mxu0 0.0
    %234 = vmatpush.msra.mxu0 0.0
    %235 = vmatpush.msra.mxu0 0.0
    %236 = vmatpush.msra.mxu0 0.0
    %237 = vmatpush.msra.mxu0 0.0
    %238 = vmatpush.msra.mxu0 0.0
    %239 = vmatpush.msra.mxu0 0.0
    %240 = vmatpush.msra.mxu0 0.0
    %241 = vmatpush.msra.mxu0 0.0
    %242 = vmatpush.msra.mxu0 0.0
    %243 = vmatpush.msra.mxu0 0.0
    %244 = vmatpush.msra.mxu0 0.0
    %245 = vmatpush.msra.mxu0 0.0
    %246 = vmatpush.msra.mxu0 0.0
    %247 = vmatpush.msra.mxu0 %v82
    %248 = vmatmul.f32.gmra.mxu0 %v230
    %v249 = vpop.f32.mrf.mxu0
    %v250 = vadd.f32 %v227, %v249
    %251 = vdwg.mxu0
    %v252 = vadd.f32 %v250, %v113
    %v253 = vxor.u32 %v252, 2147483648
    %v254 = vmul.f32 %v253, 1.442695
    %v255 = vpow.pop %v254
    %v256 = vadd.f32 %v255, 1.0
    %v257 = vrcp.pop %v256
    %v258 = vmul.f32 %v256, %v257
    %v259 = vsub.f32 1.0, %v258
    %v260 = vmul.f32 %v257, %v259
    %v261 = vadd.f32 %v257, %v260
    %vm262 = vweird.f32 %v256
    %vm263 = vweird.f32 %v257
    %vm264 = vmor %vm262, %vm263
    %v265 = vsel %vm264, %v257, %v261
    %v266 = vand.u32 2147483647, %v256
    %vm267 = vcmp.eq.f32.partialorder %v266, 8.507059e+37
    %v268 = vand.u32 %v256, 2147483648
    %v269 = vor.u32 1.1754944e-38, %v268
    %v270 = vsel %vm267, %v269, %v265
    %v271 = vmul.f32 1.0, %v270
    %v272 = vtanh.pop %v252
    %273 = vrot.lane.b32.xlu0 %v271, 96
    %v274 = vpop.permute.xlu0 %273
    %275 = vrot.lane.b32.xlu0 %v272, 64
    %v276 = vpop.permute.xlu0 %275
    %277 = vrot.lane.b32.xlu0 %v271, 32
    %v278 = vpop.permute.xlu0 %277
    %v279 = vmul.f32 %v274, %v201
    %v280 = vmul.f32 %v271, %v276
    %v281 = vadd.f32 %v279, %v280
    %v282 = vtanh.pop %v281
    %v283 = vmul.f32 %v278, %v282
    %s284 = scalar_lea.vmem %s0, 16
    %v285 = vld [vmem:[%s284] sm:$0xff]
    %v287 = vsel %vm124, %v283, 0
    %289 = vmatpush.msra.mxu0 0.0
    %290 = vmatpush.msra.mxu0 0.0
    %291 = vmatpush.msra.mxu0 0.0
    %292 = vmatpush.msra.mxu0 0.0
    %293 = vmatpush.msra.mxu0 0.0
    %294 = vmatpush.msra.mxu0 0.0
    %295 = vmatpush.msra.mxu0 0.0
    %296 = vmatpush.msra.mxu0 0.0
    %297 = vmatpush.msra.mxu0 0.0
    %298 = vmatpush.msra.mxu0 0.0
    %299 = vmatpush.msra.mxu0 0.0
    %300 = vmatpush.msra.mxu0 0.0
    %301 = vmatpush.msra.mxu0 %v86
    %302 = vmatpush.msra.mxu0 %v85
    %303 = vmatpush.msra.mxu0 %v84
    %304 = vmatpush.msra.mxu0 %v83
    %305 = vmatmul.f32.gmra.mxu0 %v287
    %v306 = vpop.f32.mrf.mxu0
    %v307 = vadd.f32 0.0, %v306
    %308 = vdwg.mxu0
    %v310 = vsel %vm148, %v285, 0
    %312 = vmatpush.msra.mxu0 0.0
    %313 = vmatpush.msra.mxu0 0.0
    %314 = vmatpush.msra.mxu0 0.0
    %315 = vmatpush.msra.mxu0 0.0
    %316 = vmatpush.msra.mxu0 0.0
    %317 = vmatpush.msra.mxu0 0.0
    %318 = vmatpush.msra.mxu0 0.0
    %319 = vmatpush.msra.mxu0 0.0
    %320 = vmatpush.msra.mxu0 0.0
    %321 = vmatpush.msra.mxu0 0.0
    %322 = vmatpush.msra.mxu0 0.0
    %323 = vmatpush.msra.mxu0 0.0
    %324 = vmatpush.msra.mxu0 0.0
    %325 = vmatpush.msra.mxu0 0.0
    %326 = vmatpush.msra.mxu0 0.0
    %327 = vmatpush.msra.mxu0 %v82
    %328 = vmatmul.f32.gmra.mxu0 %v310
    %v329 = vpop.f32.mrf.mxu0
    %v330 = vadd.f32 %v307, %v329
    %331 = vdwg.mxu0
    %v332 = vadd.f32 %v330, %v113
    %v333 = vxor.u32 %v332, 2147483648
    %v334 = vmul.f32 %v333, 1.442695
    %v335 = vpow.pop %v334
    %v336 = vadd.f32 %v335, 1.0
    %v337 = vrcp.pop %v336
    %v338 = vmul.f32 %v336, %v337
    %v339 = vsub.f32 1.0, %v338
    %v340 = vmul.f32 %v337, %v339
    %v341 = vadd.f32 %v337, %v340
    %vm342 = vweird.f32 %v336
    %vm343 = vweird.f32 %v337
    %vm344 = vmor %vm342, %vm343
    %v345 = vsel %vm344, %v337, %v341
    %v346 = vand.u32 2147483647, %v336
    %vm347 = vcmp.eq.f32.partialorder %v346, 8.507059e+37
    %v348 = vand.u32 %v336, 2147483648
    %v349 = vor.u32 1.1754944e-38, %v348
    %v350 = vsel %vm347, %v349, %v345
    %v351 = vmul.f32 1.0, %v350
    %v352 = vtanh.pop %v332
    %353 = vrot.lane.b32.xlu0 %v351, 96
    %v354 = vpop.permute.xlu0 %353
    %355 = vrot.lane.b32.xlu0 %v352, 64
    %v356 = vpop.permute.xlu0 %355
    %357 = vrot.lane.b32.xlu0 %v351, 32
    %v358 = vpop.permute.xlu0 %357
    %v359 = vmul.f32 %v354, %v281
    %v360 = vmul.f32 %v351, %v356
    %v361 = vadd.f32 %v359, %v360
    %v362 = vtanh.pop %v361
    %v363 = vmul.f32 %v358, %v362
    %s364 = scalar_lea.vmem %s0, 24
    %v365 = vld [vmem:[%s364] sm:$0xff]
    %v367 = vsel %vm124, %v363, 0
    %369 = vmatpush.msra.mxu0 0.0
    %370 = vmatpush.msra.mxu0 0.0
    %371 = vmatpush.msra.mxu0 0.0
    %372 = vmatpush.msra.mxu0 0.0
    %373 = vmatpush.msra.mxu0 0.0
    %374 = vmatpush.msra.mxu0 0.0
    %375 = vmatpush.msra.mxu0 0.0
    %376 = vmatpush.msra.mxu0 0.0
    %377 = vmatpush.msra.mxu0 0.0
    %378 = vmatpush.msra.mxu0 0.0
    %379 = vmatpush.msra.mxu0 0.0
    %380 = vmatpush.msra.mxu0 0.0
    %381 = vmatpush.msra.mxu0 %v86
    %382 = vmatpush.msra.mxu0 %v85
    %383 = vmatpush.msra.mxu0 %v84
    %384 = vmatpush.msra.mxu0 %v83
    %385 = vmatmul.f32.gmra.mxu0 %v367
    %v386 = vpop.f32.mrf.mxu0
    %v387 = vadd.f32 0.0, %v386
    %388 = vdwg.mxu0
    %v390 = vsel %vm148, %v365, 0
    %392 = vmatpush.msra.mxu0 0.0
    %393 = vmatpush.msra.mxu0 0.0
    %394 = vmatpush.msra.mxu0 0.0
    %395 = vmatpush.msra.mxu0 0.0
    %396 = vmatpush.msra.mxu0 0.0
    %397 = vmatpush.msra.mxu0 0.0
    %398 = vmatpush.msra.mxu0 0.0
    %399 = vmatpush.msra.mxu0 0.0
    %400 = vmatpush.msra.mxu0 0.0
    %401 = vmatpush.msra.mxu0 0.0
    %402 = vmatpush.msra.mxu0 0.0
    %403 = vmatpush.msra.mxu0 0.0
    %404 = vmatpush.msra.mxu0 0.0
    %405 = vmatpush.msra.mxu0 0.0
    %406 = vmatpush.msra.mxu0 0.0
    %407 = vmatpush.msra.mxu0 %v82
    %408 = vmatmul.f32.gmra.mxu0 %v390
    %v409 = vpop.f32.mrf.mxu0
    %v410 = vadd.f32 %v387, %v409
    %411 = vdwg.mxu0
    %v412 = vadd.f32 %v410, %v113
    %v413 = vxor.u32 %v412, 2147483648
    %v414 = vmul.f32 %v413, 1.442695
    %v415 = vpow.pop %v414
    %v416 = vadd.f32 %v415, 1.0
    %v417 = vrcp.pop %v416
    %v418 = vmul.f32 %v416, %v417
    %v419 = vsub.f32 1.0, %v418
    %v420 = vmul.f32 %v417, %v419
    %v421 = vadd.f32 %v417, %v420
    %vm422 = vweird.f32 %v416
    %vm423 = vweird.f32 %v417
    %vm424 = vmor %vm422, %vm423
    %v425 = vsel %vm424, %v417, %v421
    %v426 = vand.u32 2147483647, %v416
    %vm427 = vcmp.eq.f32.partialorder %v426, 8.507059e+37
    %v428 = vand.u32 %v416, 2147483648
    %v429 = vor.u32 1.1754944e-38, %v428
    %v430 = vsel %vm427, %v429, %v425
    %v431 = vmul.f32 1.0, %v430
    %v432 = vtanh.pop %v412
    %433 = vrot.lane.b32.xlu0 %v431, 96
    %v434 = vpop.permute.xlu0 %433
    %435 = vrot.lane.b32.xlu0 %v432, 64
    %v436 = vpop.permute.xlu0 %435
    %437 = vrot.lane.b32.xlu0 %v431, 32
    %v438 = vpop.permute.xlu0 %437
    %v439 = vmul.f32 %v434, %v361
    %v440 = vmul.f32 %v431, %v436
    %v441 = vadd.f32 %v439, %v440
    %v442 = vtanh.pop %v441
    %v443 = vmul.f32 %v438, %v442
    %s444 = scalar_lea.vmem %s0, 32
    %v445 = vld [vmem:[%s444] sm:$0xff]
    %v447 = vsel %vm124, %v443, 0
    %449 = vmatpush.msra.mxu0 0.0
    %450 = vmatpush.msra.mxu0 0.0
    %451 = vmatpush.msra.mxu0 0.0
    %452 = vmatpush.msra.mxu0 0.0
    %453 = vmatpush.msra.mxu0 0.0
    %454 = vmatpush.msra.mxu0 0.0
    %455 = vmatpush.msra.mxu0 0.0
    %456 = vmatpush.msra.mxu0 0.0
    %457 = vmatpush.msra.mxu0 0.0
    %458 = vmatpush.msra.mxu0 0.0
    %459 = vmatpush.msra.mxu0 0.0
    %460 = vmatpush.msra.mxu0 0.0
    %461 = vmatpush.msra.mxu0 %v86
    %462 = vmatpush.msra.mxu0 %v85
    %463 = vmatpush.msra.mxu0 %v84
    %464 = vmatpush.msra.mxu0 %v83
    %465 = vmatmul.f32.gmra.mxu0 %v447
    %v466 = vpop.f32.mrf.mxu0
    %v467 = vadd.f32 0.0, %v466
    %468 = vdwg.mxu0
    %v470 = vsel %vm148, %v445, 0
    %472 = vmatpush.msra.mxu0 0.0
    %473 = vmatpush.msra.mxu0 0.0
    %474 = vmatpush.msra.mxu0 0.0
    %475 = vmatpush.msra.mxu0 0.0
    %476 = vmatpush.msra.mxu0 0.0
    %477 = vmatpush.msra.mxu0 0.0
    %478 = vmatpush.msra.mxu0 0.0
    %479 = vmatpush.msra.mxu0 0.0
    %480 = vmatpush.msra.mxu0 0.0
    %481 = vmatpush.msra.mxu0 0.0
    %482 = vmatpush.msra.mxu0 0.0
    %483 = vmatpush.msra.mxu0 0.0
    %484 = vmatpush.msra.mxu0 0.0
    %485 = vmatpush.msra.mxu0 0.0
    %486 = vmatpush.msra.mxu0 0.0
    %487 = vmatpush.msra.mxu0 %v82
    %488 = vmatmul.f32.gmra.mxu0 %v470
    %v489 = vpop.f32.mrf.mxu0
    %v490 = vadd.f32 %v467, %v489
    %491 = vdwg.mxu0
    %v492 = vadd.f32 %v490, %v113
    %v493 = vxor.u32 %v492, 2147483648
    %v494 = vmul.f32 %v493, 1.442695
    %v495 = vpow.pop %v494
    %v496 = vadd.f32 %v495, 1.0
    %v497 = vrcp.pop %v496
    %v498 = vmul.f32 %v496, %v497
    %v499 = vsub.f32 1.0, %v498
    %v500 = vmul.f32 %v497, %v499
    %v501 = vadd.f32 %v497, %v500
    %vm502 = vweird.f32 %v496
    %vm503 = vweird.f32 %v497
    %vm504 = vmor %vm502, %vm503
    %v505 = vsel %vm504, %v497, %v501
    %v506 = vand.u32 2147483647, %v496
    %vm507 = vcmp.eq.f32.partialorder %v506, 8.507059e+37
    %v508 = vand.u32 %v496, 2147483648
    %v509 = vor.u32 1.1754944e-38, %v508
    %v510 = vsel %vm507, %v509, %v505
    %v511 = vmul.f32 1.0, %v510
    %v512 = vtanh.pop %v492
    %513 = vrot.lane.b32.xlu0 %v511, 96
    %v514 = vpop.permute.xlu0 %513
    %515 = vrot.lane.b32.xlu0 %v512, 64
    %v516 = vpop.permute.xlu0 %515
    %517 = vrot.lane.b32.xlu0 %v511, 32
    %v518 = vpop.permute.xlu0 %517
    %v519 = vmul.f32 %v514, %v441
    %v520 = vmul.f32 %v511, %v516
    %v521 = vadd.f32 %v519, %v520
    %v522 = vtanh.pop %v521
    %v523 = vmul.f32 %v518, %v522
    %s524 = scalar_lea.vmem %s0, 40
    %v525 = vld [vmem:[%s524] sm:$0xff]
    %v527 = vsel %vm124, %v523, 0
    %529 = vmatpush.msra.mxu0 0.0
    %530 = vmatpush.msra.mxu0 0.0
    %531 = vmatpush.msra.mxu0 0.0
    %532 = vmatpush.msra.mxu0 0.0
    %533 = vmatpush.msra.mxu0 0.0
    %534 = vmatpush.msra.mxu0 0.0
    %535 = vmatpush.msra.mxu0 0.0
    %536 = vmatpush.msra.mxu0 0.0
    %537 = vmatpush.msra.mxu0 0.0
    %538 = vmatpush.msra.mxu0 0.0
    %539 = vmatpush.msra.mxu0 0.0
    %540 = vmatpush.msra.mxu0 0.0
    %541 = vmatpush.msra.mxu0 %v86
    %542 = vmatpush.msra.mxu0 %v85
    %543 = vmatpush.msra.mxu0 %v84
    %544 = vmatpush.msra.mxu0 %v83
    %545 = vmatmul.f32.gmra.mxu0 %v527
    %v546 = vpop.f32.mrf.mxu0
    %v547 = vadd.f32 0.0, %v546
    %548 = vdwg.mxu0
    %v550 = vsel %vm148, %v525, 0
    %552 = vmatpush.msra.mxu0 0.0
    %553 = vmatpush.msra.mxu0 0.0
    %554 = vmatpush.msra.mxu0 0.0
    %555 = vmatpush.msra.mxu0 0.0
    %556 = vmatpush.msra.mxu0 0.0
    %557 = vmatpush.msra.mxu0 0.0
    %558 = vmatpush.msra.mxu0 0.0
    %559 = vmatpush.msra.mxu0 0.0
    %560 = vmatpush.msra.mxu0 0.0
    %561 = vmatpush.msra.mxu0 0.0
    %562 = vmatpush.msra.mxu0 0.0
    %563 = vmatpush.msra.mxu0 0.0
    %564 = vmatpush.msra.mxu0 0.0
    %565 = vmatpush.msra.mxu0 0.0
    %566 = vmatpush.msra.mxu0 0.0
    %567 = vmatpush.msra.mxu0 %v82
    %568 = vmatmul.f32.gmra.mxu0 %v550
    %v569 = vpop.f32.mrf.mxu0
    %v570 = vadd.f32 %v547, %v569
    %571 = vdwg.mxu0
    %v572 = vadd.f32 %v570, %v113
    %v573 = vxor.u32 %v572, 2147483648
    %v574 = vmul.f32 %v573, 1.442695
    %v575 = vpow.pop %v574
    %v576 = vadd.f32 %v575, 1.0
    %v577 = vrcp.pop %v576
    %v578 = vmul.f32 %v576, %v577
    %v579 = vsub.f32 1.0, %v578
    %v580 = vmul.f32 %v577, %v579
    %v581 = vadd.f32 %v577, %v580
    %vm582 = vweird.f32 %v576
    %vm583 = vweird.f32 %v577
    %vm584 = vmor %vm582, %vm583
    %v585 = vsel %vm584, %v577, %v581
    %v586 = vand.u32 2147483647, %v576
    %vm587 = vcmp.eq.f32.partialorder %v586, 8.507059e+37
    %v588 = vand.u32 %v576, 2147483648
    %v589 = vor.u32 1.1754944e-38, %v588
    %v590 = vsel %vm587, %v589, %v585
    %v591 = vmul.f32 1.0, %v590
    %v592 = vtanh.pop %v572
    %593 = vrot.lane.b32.xlu0 %v591, 96
    %v594 = vpop.permute.xlu0 %593
    %595 = vrot.lane.b32.xlu0 %v592, 64
    %v596 = vpop.permute.xlu0 %595
    %597 = vrot.lane.b32.xlu0 %v591, 32
    %v598 = vpop.permute.xlu0 %597
    %v599 = vmul.f32 %v594, %v521
    %v600 = vmul.f32 %v591, %v596
    %v601 = vadd.f32 %v599, %v600
    %v602 = vtanh.pop %v601
    %v603 = vmul.f32 %v598, %v602
    %v604 = vld [vmem:[%s1] sm:$0xff]
    %v605 = vlaneseq
    %v606 = vand.u32 %v605, 127
    %v608 = vsel %vm124, %v603, 0
    %610 = vmatpush.msra.mxu0 0.0
    %611 = vmatpush.msra.mxu0 0.0
    %612 = vmatpush.msra.mxu0 0.0
    %613 = vmatpush.msra.mxu0 0.0
    %614 = vmatpush.msra.mxu0 0.0
    %615 = vmatpush.msra.mxu0 0.0
    %616 = vmatpush.msra.mxu0 0.0
    %617 = vmatpush.msra.mxu0 0.0
    %618 = vmatpush.msra.mxu0 0.0
    %619 = vmatpush.msra.mxu0 0.0
    %620 = vmatpush.msra.mxu0 0.0
    %621 = vmatpush.msra.mxu0 0.0
    %622 = vmatpush.msra.mxu0 %v106
    %623 = vmatpush.msra.mxu0 %v105
    %624 = vmatpush.msra.mxu0 %v104
    %625 = vmatpush.msra.mxu0 %v103
    %626 = vmatmul.f32.gmra.mxu0 %v608
    %v627 = vpop.f32.mrf.mxu0
    %v628 = vadd.f32 0.0, %v627
    %629 = vdwg.mxu0
    %630 = vmatpush.msra.mxu0 %v102
    %631 = vmatpush.msra.mxu0 %v101
    %632 = vmatpush.msra.mxu0 %v100
    %633 = vmatpush.msra.mxu0 %v99
    %634 = vmatpush.msra.mxu0 %v98
    %635 = vmatpush.msra.mxu0 %v97
    %636 = vmatpush.msra.mxu0 %v96
    %637 = vmatpush.msra.mxu0 %v95
    %638 = vmatpush.msra.mxu0 %v94
    %639 = vmatpush.msra.mxu0 %v93
    %640 = vmatpush.msra.mxu0 %v92
    %641 = vmatpush.msra.mxu0 %v91
    %642 = vmatpush.msra.mxu0 %v90
    %643 = vmatpush.msra.mxu0 %v89
    %644 = vmatpush.msra.mxu0 %v88
    %645 = vmatpush.msra.mxu0 %v87
    %646 = vmatmul.f32.gmra.mxu0 %v604
    %v647 = vpop.f32.mrf.mxu0
    %v648 = vadd.f32 %v628, %v647
    %649 = vdwg.mxu0
    %v650 = vadd.f32 %v648, %v117
    %v651 = vxor.u32 %v650, 2147483648
    %v652 = vmul.f32 %v651, 1.442695
    %v653 = vpow.pop %v652
    %v654 = vadd.f32 %v653, 1.0
    %v655 = vrcp.pop %v654
    %v656 = vmul.f32 %v654, %v655
    %v657 = vsub.f32 1.0, %v656
    %v658 = vmul.f32 %v655, %v657
    %v659 = vadd.f32 %v655, %v658
    %vm660 = vweird.f32 %v654
    %vm661 = vweird.f32 %v655
    %vm662 = vmor %vm660, %vm661
    %v663 = vsel %vm662, %v655, %v659
    %v664 = vand.u32 2147483647, %v654
    %vm665 = vcmp.eq.f32.partialorder %v664, 8.507059e+37
    %v666 = vand.u32 %v654, 2147483648
    %v667 = vor.u32 1.1754944e-38, %v666
    %v668 = vsel %vm665, %v667, %v663
    %v669 = vmul.f32 1.0, %v668
    %v670 = vtanh.pop %v650
    %671 = vrot.lane.b32.xlu0 %v669, 96
    %v672 = vpop.permute.xlu0 %671
    %673 = vrot.lane.b32.xlu0 %v670, 64
    %v674 = vpop.permute.xlu0 %673
    %675 = vrot.lane.b32.xlu0 %v669, 32
    %v676 = vpop.permute.xlu0 %675
    %v677 = vmul.f32 %v672, %v601
    %v678 = vmul.f32 %v669, %v674
    %v679 = vadd.f32 %v677, %v678
    %v680 = vtanh.pop %v679
    %v681 = vmul.f32 %v676, %v680
    %v683 = vsel %vm124, %v681, 0
    %685 = vmatpush.msra.mxu0 0.0
    %686 = vmatpush.msra.mxu0 0.0
    %687 = vmatpush.msra.mxu0 0.0
    %688 = vmatpush.msra.mxu0 0.0
    %689 = vmatpush.msra.mxu0 0.0
    %690 = vmatpush.msra.mxu0 0.0
    %691 = vmatpush.msra.mxu0 0.0
    %692 = vmatpush.msra.mxu0 0.0
    %693 = vmatpush.msra.mxu0 0.0
    %694 = vmatpush.msra.mxu0 0.0
    %695 = vmatpush.msra.mxu0 0.0
    %696 = vmatpush.msra.mxu0 0.0
    %697 = vmatpush.msra.mxu0 %v110
    %698 = vmatpush.msra.mxu0 %v109
    %699 = vmatpush.msra.mxu0 %v108
    %700 = vmatpush.msra.mxu0 %v107
    %701 = vmatmul.f32.gmra.mxu0 %v683
    %v702 = vpop.f32.mrf.mxu0
    %v703 = vadd.f32 %v121, %v702
    %704 = vdwg.mxu0
    %705 = vst [vmem:[%s10] sm:$0xff] %v703
    %706 = vmax.xlane.f32.xlu0 %v703
    %v707 = vpop.xlane.xlu0 %706
    %vm708 = vcmp.eq.f32.partialorder %v703, %v707
    %v709 = vsel %vm708, %v606, 128
    %v710 = vand.u32 %v709, 65535
    %v711 = vshra.s32 %v709, 16
    %v712 = vcvt.s32.f32 %v710
    %v713 = vcvt.s32.f32 %v711
    %714 = vmin.xlane.f32.xlu0 %v713
    %v715 = vpop.xlane.xlu0 %714
    %vm716 = vcmp.eq.f32.partialorder %v713, %v715
    %v717 = vsel %vm716, %v712, inf
    %718 = vmin.xlane.f32.xlu0 %v717
    %v719 = vpop.xlane.xlu0 %718
    %v720 = vcvt.f32.s32 %v719
    %v721 = vcvt.f32.s32 %v715
    %v722 = vshll.u32 %v721, 16
    %v723 = vadd.s32 %v722, %v720
    %vm724 = vcmp.eq.s32.totalorder %v606, %v723
    %v725 = vsel %vm724, 1, 0
    %v726 = vcvt.s32.f32 %v725
    %727 = vmatpush.msra.mxu0 0.0
    %728 = vmatpush.msra.mxu0 0.0
    %729 = vmatpush.msra.mxu0 0.0
    %730 = vmatpush.msra.mxu0 0.0
    %731 = vmatpush.msra.mxu0 0.0
    %732 = vmatpush.msra.mxu0 0.0
    %733 = vmatpush.msra.mxu0 0.0
    %734 = vmatpush.msra.mxu0 0.0
    %735 = vmatpush.msra.mxu0 0.0
    %736 = vmatpush.msra.mxu0 0.0
    %737 = vmatpush.msra.mxu0 0.0
    %738 = vmatpush.msra.mxu0 0.0
    %739 = vmatpush.msra.mxu0 %v106
    %740 = vmatpush.msra.mxu0 %v105
    %741 = vmatpush.msra.mxu0 %v104
    %742 = vmatpush.msra.mxu0 %v103
    %743 = vmatmul.f32.gmra.mxu0 %v683
    %v744 = vpop.f32.mrf.mxu0
    %v745 = vadd.f32 0.0, %v744
    %746 = vdwg.mxu0
    %747 = vmatpush.msra.mxu0 %v102
    %748 = vmatpush.msra.mxu0 %v101
    %749 = vmatpush.msra.mxu0 %v100
    %750 = vmatpush.msra.mxu0 %v99
    %751 = vmatpush.msra.mxu0 %v98
    %752 = vmatpush.msra.mxu0 %v97
    %753 = vmatpush.msra.mxu0 %v96
    %754 = vmatpush.msra.mxu0 %v95
    %755 = vmatpush.msra.mxu0 %v94
    %756 = vmatpush.msra.mxu0 %v93
    %757 = vmatpush.msra.mxu0 %v92
    %758 = vmatpush.msra.mxu0 %v91
    %759 = vmatpush.msra.mxu0 %v90
    %760 = vmatpush.msra.mxu0 %v89
    %761 = vmatpush.msra.mxu0 %v88
    %762 = vmatpush.msra.mxu0 %v87
    %763 = vmatmul.f32.gmra.mxu0 %v726
    %v764 = vpop.f32.mrf.mxu0
    %v765 = vadd.f32 %v745, %v764
    %766 = vdwg.mxu0
    %v767 = vadd.f32 %v765, %v117
    %v768 = vxor.u32 %v767, 2147483648
    %v769 = vmul.f32 %v768, 1.442695
    %v770 = vpow.pop %v769
    %v771 = vadd.f32 %v770, 1.0
    %v772 = vrcp.pop %v771
    %v773 = vmul.f32 %v771, %v772
    %v774 = vsub.f32 1.0, %v773
    %v775 = vmul.f32 %v772, %v774
    %v776 = vadd.f32 %v772, %v775
    %vm777 = vweird.f32 %v771
    %vm778 = vweird.f32 %v772
    %vm779 = vmor %vm777, %vm778
    %v780 = vsel %vm779, %v772, %v776
    %v781 = vand.u32 2147483647, %v771
    %vm782 = vcmp.eq.f32.partialorder %v781, 8.507059e+37
    %v783 = vand.u32 %v771, 2147483648
    %v784 = vor.u32 1.1754944e-38, %v783
    %v785 = vsel %vm782, %v784, %v780
    %v786 = vmul.f32 1.0, %v785
    %v787 = vtanh.pop %v767
    %788 = vrot.lane.b32.xlu0 %v786, 96
    %v789 = vpop.permute.xlu0 %788
    %790 = vrot.lane.b32.xlu0 %v787, 64
    %v791 = vpop.permute.xlu0 %790
    %792 = vrot.lane.b32.xlu0 %v786, 32
    %v793 = vpop.permute.xlu0 %792
    %v794 = vmul.f32 %v789, %v679
    %v795 = vmul.f32 %v786, %v791
    %v796 = vadd.f32 %v794, %v795
    %v797 = vtanh.pop %v796
    %v798 = vmul.f32 %v793, %v797
    %v800 = vsel %vm124, %v798, 0
    %802 = vmatpush.msra.mxu0 0.0
    %803 = vmatpush.msra.mxu0 0.0
    %804 = vmatpush.msra.mxu0 0.0
    %805 = vmatpush.msra.mxu0 0.0
    %806 = vmatpush.msra.mxu0 0.0
    %807 = vmatpush.msra.mxu0 0.0
    %808 = vmatpush.msra.mxu0 0.0
    %809 = vmatpush.msra.mxu0 0.0
    %810 = vmatpush.msra.mxu0 0.0
    %811 = vmatpush.msra.mxu0 0.0
    %812 = vmatpush.msra.mxu0 0.0
    %813 = vmatpush.msra.mxu0 0.0
    %814 = vmatpush.msra.mxu0 %v110
    %815 = vmatpush.msra.mxu0 %v109
    %816 = vmatpush.msra.mxu0 %v108
    %817 = vmatpush.msra.mxu0 %v107
    %818 = vmatmul.f32.gmra.mxu0 %v800
    %v819 = vpop.f32.mrf.mxu0
    %v820 = vadd.f32 %v121, %v819
    %821 = vdwg.mxu0
    %s822 = scalar_lea.vmem %s10, 8
    %823 = vst [vmem:[%s822] sm:$0xff] %v820
    %824 = vmax.xlane.f32.xlu0 %v820
    %v825 = vpop.xlane.xlu0 %824
    %vm826 = vcmp.eq.f32.partialorder %v820, %v825
    %v827 = vsel %vm826, %v606, 128
    %v828 = vand.u32 %v827, 65535
    %v829 = vshra.s32 %v827, 16
    %v830 = vcvt.s32.f32 %v828
    %v831 = vcvt.s32.f32 %v829
    %832 = vmin.xlane.f32.xlu0 %v831
    %v833 = vpop.xlane.xlu0 %832
    %vm834 = vcmp.eq.f32.partialorder %v831, %v833
    %v835 = vsel %vm834, %v830, inf
    %836 = vmin.xlane.f32.xlu0 %v835
    %v837 = vpop.xlane.xlu0 %836
    %v838 = vcvt.f32.s32 %v837
    %v839 = vcvt.f32.s32 %v833
    %v840 = vshll.u32 %v839, 16
    %v841 = vadd.s32 %v840, %v838
    %vm842 = vcmp.eq.s32.totalorder %v606, %v841
    %v843 = vsel %vm842, 1, 0
    %v844 = vcvt.s32.f32 %v843
    %845 = vmatpush.msra.mxu0 0.0
    %846 = vmatpush.msra.mxu0 0.0
    %847 = vmatpush.msra.mxu0 0.0
    %848 = vmatpush.msra.mxu0 0.0
    %849 = vmatpush.msra.mxu0 0.0
    %850 = vmatpush.msra.mxu0 0.0
    %851 = vmatpush.msra.mxu0 0.0
    %852 = vmatpush.msra.mxu0 0.0
    %853 = vmatpush.msra.mxu0 0.0
    %854 = vmatpush.msra.mxu0 0.0
    %855 = vmatpush.msra.mxu0 0.0
    %856 = vmatpush.msra.mxu0 0.0
    %857 = vmatpush.msra.mxu0 %v106
    %858 = vmatpush.msra.mxu0 %v105
    %859 = vmatpush.msra.mxu0 %v104
    %860 = vmatpush.msra.mxu0 %v103
    %861 = vmatmul.f32.gmra.mxu0 %v800
    %v862 = vpop.f32.mrf.mxu0
    %v863 = vadd.f32 0.0, %v862
    %864 = vdwg.mxu0
    %865 = vmatpush.msra.mxu0 %v102
    %866 = vmatpush.msra.mxu0 %v101
    %867 = vmatpush.msra.mxu0 %v100
    %868 = vmatpush.msra.mxu0 %v99
    %869 = vmatpush.msra.mxu0 %v98
    %870 = vmatpush.msra.mxu0 %v97
    %871 = vmatpush.msra.mxu0 %v96
    %872 = vmatpush.msra.mxu0 %v95
    %873 = vmatpush.msra.mxu0 %v94
    %874 = vmatpush.msra.mxu0 %v93
    %875 = vmatpush.msra.mxu0 %v92
    %876 = vmatpush.msra.mxu0 %v91
    %877 = vmatpush.msra.mxu0 %v90
    %878 = vmatpush.msra.mxu0 %v89
    %879 = vmatpush.msra.mxu0 %v88
    %880 = vmatpush.msra.mxu0 %v87
    %881 = vmatmul.f32.gmra.mxu0 %v844
    %v882 = vpop.f32.mrf.mxu0
    %v883 = vadd.f32 %v863, %v882
    %884 = vdwg.mxu0
    %v885 = vadd.f32 %v883, %v117
    %v886 = vxor.u32 %v885, 2147483648
    %v887 = vmul.f32 %v886, 1.442695
    %v888 = vpow.pop %v887
    %v889 = vadd.f32 %v888, 1.0
    %v890 = vrcp.pop %v889
    %v891 = vmul.f32 %v889, %v890
    %v892 = vsub.f32 1.0, %v891
    %v893 = vmul.f32 %v890, %v892
    %v894 = vadd.f32 %v890, %v893
    %vm895 = vweird.f32 %v889
    %vm896 = vweird.f32 %v890
    %vm897 = vmor %vm895, %vm896
    %v898 = vsel %vm897, %v890, %v894
    %v899 = vand.u32 2147483647, %v889
    %vm900 = vcmp.eq.f32.partialorder %v899, 8.507059e+37
    %v901 = vand.u32 %v889, 2147483648
    %v902 = vor.u32 1.1754944e-38, %v901
    %v903 = vsel %vm900, %v902, %v898
    %v904 = vmul.f32 1.0, %v903
    %v905 = vtanh.pop %v885
    %906 = vrot.lane.b32.xlu0 %v904, 96
    %v907 = vpop.permute.xlu0 %906
    %908 = vrot.lane.b32.xlu0 %v905, 64
    %v909 = vpop.permute.xlu0 %908
    %910 = vrot.lane.b32.xlu0 %v904, 32
    %v911 = vpop.permute.xlu0 %910
    %v912 = vmul.f32 %v907, %v796
    %v913 = vmul.f32 %v904, %v909
    %v914 = vadd.f32 %v912, %v913
    %v915 = vtanh.pop %v914
    %v916 = vmul.f32 %v911, %v915
    %v918 = vsel %vm124, %v916, 0
    %920 = vmatpush.msra.mxu0 0.0
    %921 = vmatpush.msra.mxu0 0.0
    %922 = vmatpush.msra.mxu0 0.0
    %923 = vmatpush.msra.mxu0 0.0
    %924 = vmatpush.msra.mxu0 0.0
    %925 = vmatpush.msra.mxu0 0.0
    %926 = vmatpush.msra.mxu0 0.0
    %927 = vmatpush.msra.mxu0 0.0
    %928 = vmatpush.msra.mxu0 0.0
    %929 = vmatpush.msra.mxu0 0.0
    %930 = vmatpush.msra.mxu0 0.0
    %931 = vmatpush.msra.mxu0 0.0
    %932 = vmatpush.msra.mxu0 %v110
    %933 = vmatpush.msra.mxu0 %v109
    %934 = vmatpush.msra.mxu0 %v108
    %935 = vmatpush.msra.mxu0 %v107
    %936 = vmatmul.f32.gmra.mxu0 %v918
    %v937 = vpop.f32.mrf.mxu0
    %v938 = vadd.f32 %v121, %v937
    %939 = vdwg.mxu0
    %s940 = scalar_lea.vmem %s10, 16
    %941 = vst [vmem:[%s940] sm:$0xff] %v938
    %942 = vmax.xlane.f32.xlu0 %v938
    %v943 = vpop.xlane.xlu0 %942
    %vm944 = vcmp.eq.f32.partialorder %v938, %v943
    %v945 = vsel %vm944, %v606, 128
    %v946 = vand.u32 %v945, 65535
    %v947 = vshra.s32 %v945, 16
    %v948 = vcvt.s32.f32 %v946
    %v949 = vcvt.s32.f32 %v947
    %950 = vmin.xlane.f32.xlu0 %v949
    %v951 = vpop.xlane.xlu0 %950
    %vm952 = vcmp.eq.f32.partialorder %v949, %v951
    %v953 = vsel %vm952, %v948, inf
    %954 = vmin.xlane.f32.xlu0 %v953
    %v955 = vpop.xlane.xlu0 %954
    %v956 = vcvt.f32.s32 %v955
    %v957 = vcvt.f32.s32 %v951
    %v958 = vshll.u32 %v957, 16
    %v959 = vadd.s32 %v958, %v956
    %vm960 = vcmp.eq.s32.totalorder %v606, %v959
    %v961 = vsel %vm960, 1, 0
    %v962 = vcvt.s32.f32 %v961
    %963 = vmatpush.msra.mxu0 0.0
    %964 = vmatpush.msra.mxu0 0.0
    %965 = vmatpush.msra.mxu0 0.0
    %966 = vmatpush.msra.mxu0 0.0
    %967 = vmatpush.msra.mxu0 0.0
    %968 = vmatpush.msra.mxu0 0.0
    %969 = vmatpush.msra.mxu0 0.0
    %970 = vmatpush.msra.mxu0 0.0
    %971 = vmatpush.msra.mxu0 0.0
    %972 = vmatpush.msra.mxu0 0.0
    %973 = vmatpush.msra.mxu0 0.0
    %974 = vmatpush.msra.mxu0 0.0
    %975 = vmatpush.msra.mxu0 %v106
    %976 = vmatpush.msra.mxu0 %v105
    %977 = vmatpush.msra.mxu0 %v104
    %978 = vmatpush.msra.mxu0 %v103
    %979 = vmatmul.f32.gmra.mxu0 %v918
    %v980 = vpop.f32.mrf.mxu0
    %v981 = vadd.f32 0.0, %v980
    %982 = vdwg.mxu0
    %983 = vmatpush.msra.mxu0 %v102
    %984 = vmatpush.msra.mxu0 %v101
    %985 = vmatpush.msra.mxu0 %v100
    %986 = vmatpush.msra.mxu0 %v99
    %987 = vmatpush.msra.mxu0 %v98
    %988 = vmatpush.msra.mxu0 %v97
    %989 = vmatpush.msra.mxu0 %v96
    %990 = vmatpush.msra.mxu0 %v95
    %991 = vmatpush.msra.mxu0 %v94
    %992 = vmatpush.msra.mxu0 %v93
    %993 = vmatpush.msra.mxu0 %v92
    %994 = vmatpush.msra.mxu0 %v91
    %995 = vmatpush.msra.mxu0 %v90
    %996 = vmatpush.msra.mxu0 %v89
    %997 = vmatpush.msra.mxu0 %v88
    %998 = vmatpush.msra.mxu0 %v87
    %999 = vmatmul.f32.gmra.mxu0 %v962
    %v1000 = vpop.f32.mrf.mxu0
    %v1001 = vadd.f32 %v981, %v1000
    %1002 = vdwg.mxu0
    %v1003 = vadd.f32 %v1001, %v117
    %v1004 = vxor.u32 %v1003, 2147483648
    %v1005 = vmul.f32 %v1004, 1.442695
    %v1006 = vpow.pop %v1005
    %v1007 = vadd.f32 %v1006, 1.0
    %v1008 = vrcp.pop %v1007
    %v1009 = vmul.f32 %v1007, %v1008
    %v1010 = vsub.f32 1.0, %v1009
    %v1011 = vmul.f32 %v1008, %v1010
    %v1012 = vadd.f32 %v1008, %v1011
    %vm1013 = vweird.f32 %v1007
    %vm1014 = vweird.f32 %v1008
    %vm1015 = vmor %vm1013, %vm1014
    %v1016 = vsel %vm1015, %v1008, %v1012
    %v1017 = vand.u32 2147483647, %v1007
    %vm1018 = vcmp.eq.f32.partialorder %v1017, 8.507059e+37
    %v1019 = vand.u32 %v1007, 2147483648
    %v1020 = vor.u32 1.1754944e-38, %v1019
    %v1021 = vsel %vm1018, %v1020, %v1016
    %v1022 = vmul.f32 1.0, %v1021
    %v1023 = vtanh.pop %v1003
    %1024 = vrot.lane.b32.xlu0 %v1022, 96
    %v1025 = vpop.permute.xlu0 %1024
    %1026 = vrot.lane.b32.xlu0 %v1023, 64
    %v1027 = vpop.permute.xlu0 %1026
    %1028 = vrot.lane.b32.xlu0 %v1022, 32
    %v1029 = vpop.permute.xlu0 %1028
    %v1030 = vmul.f32 %v1025, %v914
    %v1031 = vmul.f32 %v1022, %v1027
    %v1032 = vadd.f32 %v1030, %v1031
    %v1033 = vtanh.pop %v1032
    %v1034 = vmul.f32 %v1029, %v1033
    %v1036 = vsel %vm124, %v1034, 0
    %1038 = vmatpush.msra.mxu0 0.0
    %1039 = vmatpush.msra.mxu0 0.0
    %1040 = vmatpush.msra.mxu0 0.0
    %1041 = vmatpush.msra.mxu0 0.0
    %1042 = vmatpush.msra.mxu0 0.0
    %1043 = vmatpush.msra.mxu0 0.0
    %1044 = vmatpush.msra.mxu0 0.0
    %1045 = vmatpush.msra.mxu0 0.0
    %1046 = vmatpush.msra.mxu0 0.0
    %1047 = vmatpush.msra.mxu0 0.0
    %1048 = vmatpush.msra.mxu0 0.0
    %1049 = vmatpush.msra.mxu0 0.0
    %1050 = vmatpush.msra.mxu0 %v110
    %1051 = vmatpush.msra.mxu0 %v109
    %1052 = vmatpush.msra.mxu0 %v108
    %1053 = vmatpush.msra.mxu0 %v107
    %1054 = vmatmul.f32.gmra.mxu0 %v1036
    %v1055 = vpop.f32.mrf.mxu0
    %v1056 = vadd.f32 %v121, %v1055
    %1057 = vdwg.mxu0
    %s1058 = scalar_lea.vmem %s10, 24
    %1059 = vst [vmem:[%s1058] sm:$0xff] %v1056
    %1060 = vmax.xlane.f32.xlu0 %v1056
    %v1061 = vpop.xlane.xlu0 %1060
    %vm1062 = vcmp.eq.f32.partialorder %v1056, %v1061
    %v1063 = vsel %vm1062, %v606, 128
    %v1064 = vand.u32 %v1063, 65535
    %v1065 = vshra.s32 %v1063, 16
    %v1066 = vcvt.s32.f32 %v1064
    %v1067 = vcvt.s32.f32 %v1065
    %1068 = vmin.xlane.f32.xlu0 %v1067
    %v1069 = vpop.xlane.xlu0 %1068
    %vm1070 = vcmp.eq.f32.partialorder %v1067, %v1069
    %v1071 = vsel %vm1070, %v1066, inf
    %1072 = vmin.xlane.f32.xlu0 %v1071
    %v1073 = vpop.xlane.xlu0 %1072
    %v1074 = vcvt.f32.s32 %v1073
    %v1075 = vcvt.f32.s32 %v1069
    %v1076 = vshll.u32 %v1075, 16
    %v1077 = vadd.s32 %v1076, %v1074
    %vm1078 = vcmp.eq.s32.totalorder %v606, %v1077
    %v1079 = vsel %vm1078, 1, 0
    %v1080 = vcvt.s32.f32 %v1079
    %1081 = vmatpush.msra.mxu0 0.0
    %1082 = vmatpush.msra.mxu0 0.0
    %1083 = vmatpush.msra.mxu0 0.0
    %1084 = vmatpush.msra.mxu0 0.0
    %1085 = vmatpush.msra.mxu0 0.0
    %1086 = vmatpush.msra.mxu0 0.0
    %1087 = vmatpush.msra.mxu0 0.0
    %1088 = vmatpush.msra.mxu0 0.0
    %1089 = vmatpush.msra.mxu0 0.0
    %1090 = vmatpush.msra.mxu0 0.0
    %1091 = vmatpush.msra.mxu0 0.0
    %1092 = vmatpush.msra.mxu0 0.0
    %1093 = vmatpush.msra.mxu0 %v106
    %1094 = vmatpush.msra.mxu0 %v105
    %1095 = vmatpush.msra.mxu0 %v104
    %1096 = vmatpush.msra.mxu0 %v103
    %1097 = vmatmul.f32.gmra.mxu0 %v1036
    %v1098 = vpop.f32.mrf.mxu0
    %v1099 = vadd.f32 0.0, %v1098
    %1100 = vdwg.mxu0
    %1101 = vmatpush.msra.mxu0 %v102
    %1102 = vmatpush.msra.mxu0 %v101
    %1103 = vmatpush.msra.mxu0 %v100
    %1104 = vmatpush.msra.mxu0 %v99
    %1105 = vmatpush.msra.mxu0 %v98
    %1106 = vmatpush.msra.mxu0 %v97
    %1107 = vmatpush.msra.mxu0 %v96
    %1108 = vmatpush.msra.mxu0 %v95
    %1109 = vmatpush.msra.mxu0 %v94
    %1110 = vmatpush.msra.mxu0 %v93
    %1111 = vmatpush.msra.mxu0 %v92
    %1112 = vmatpush.msra.mxu0 %v91
    %1113 = vmatpush.msra.mxu0 %v90
    %1114 = vmatpush.msra.mxu0 %v89
    %1115 = vmatpush.msra.mxu0 %v88
    %1116 = vmatpush.msra.mxu0 %v87
    %1117 = vmatmul.f32.gmra.mxu0 %v1080
    %v1118 = vpop.f32.mrf.mxu0
    %v1119 = vadd.f32 %v1099, %v1118
    %1120 = vdwg.mxu0
    %v1121 = vadd.f32 %v1119, %v117
    %v1122 = vxor.u32 %v1121, 2147483648
    %v1123 = vmul.f32 %v1122, 1.442695
    %v1124 = vpow.pop %v1123
    %v1125 = vadd.f32 %v1124, 1.0
    %v1126 = vrcp.pop %v1125
    %v1127 = vmul.f32 %v1125, %v1126
    %v1128 = vsub.f32 1.0, %v1127
    %v1129 = vmul.f32 %v1126, %v1128
    %v1130 = vadd.f32 %v1126, %v1129
    %vm1131 = vweird.f32 %v1125
    %vm1132 = vweird.f32 %v1126
    %vm1133 = vmor %vm1131, %vm1132
    %v1134 = vsel %vm1133, %v1126, %v1130
    %v1135 = vand.u32 2147483647, %v1125
    %vm1136 = vcmp.eq.f32.partialorder %v1135, 8.507059e+37
    %v1137 = vand.u32 %v1125, 2147483648
    %v1138 = vor.u32 1.1754944e-38, %v1137
    %v1139 = vsel %vm1136, %v1138, %v1134
    %v1140 = vmul.f32 1.0, %v1139
    %v1141 = vtanh.pop %v1121
    %1142 = vrot.lane.b32.xlu0 %v1140, 96
    %v1143 = vpop.permute.xlu0 %1142
    %1144 = vrot.lane.b32.xlu0 %v1141, 64
    %v1145 = vpop.permute.xlu0 %1144
    %1146 = vrot.lane.b32.xlu0 %v1140, 32
    %v1147 = vpop.permute.xlu0 %1146
    %v1148 = vmul.f32 %v1143, %v1032
    %v1149 = vmul.f32 %v1140, %v1145
    %v1150 = vadd.f32 %v1148, %v1149
    %v1151 = vtanh.pop %v1150
    %v1152 = vmul.f32 %v1147, %v1151
    %v1154 = vsel %vm124, %v1152, 0
    %1156 = vmatpush.msra.mxu0 0.0
    %1157 = vmatpush.msra.mxu0 0.0
    %1158 = vmatpush.msra.mxu0 0.0
    %1159 = vmatpush.msra.mxu0 0.0
    %1160 = vmatpush.msra.mxu0 0.0
    %1161 = vmatpush.msra.mxu0 0.0
    %1162 = vmatpush.msra.mxu0 0.0
    %1163 = vmatpush.msra.mxu0 0.0
    %1164 = vmatpush.msra.mxu0 0.0
    %1165 = vmatpush.msra.mxu0 0.0
    %1166 = vmatpush.msra.mxu0 0.0
    %1167 = vmatpush.msra.mxu0 0.0
    %1168 = vmatpush.msra.mxu0 %v110
    %1169 = vmatpush.msra.mxu0 %v109
    %1170 = vmatpush.msra.mxu0 %v108
    %1171 = vmatpush.msra.mxu0 %v107
    %1172 = vmatmul.f32.gmra.mxu0 %v1154
    %v1173 = vpop.f32.mrf.mxu0
    %v1174 = vadd.f32 %v121, %v1173
    %1175 = vdwg.mxu0
    %s1176 = scalar_lea.vmem %s10, 32
    %1177 = vst [vmem:[%s1176] sm:$0xff] %v1174
    // Predicated region
    $region54: #{_seq2seq_forward_jit.1} parent=1 // pred_check
      _
    $region55: #{_seq2seq_forward_jit.1} parent=1 // pred_check_branch
      %1179 = sbr.rel (0) target = $region57
    $region56: #{_seq2seq_forward_jit.1} parent=1 // pred_region
      _
    $region57: #{_seq2seq_forward_jit.1} parent=1 // pred_fallthru
      _
    // Predicated region
    $region58: #{_seq2seq_forward_jit.1} parent=1 // pred_check
      _
    $region59: #{_seq2seq_forward_jit.1} parent=1 // pred_check_branch
      %1181 = sbr.rel (0) target = $region61
    $region60: #{_seq2seq_forward_jit.1} parent=1 // pred_region
      _
    $region61: #{_seq2seq_forward_jit.1} parent=1 // pred_fallthru
      _
    %1182 = vsyncpa [#allocation3], 1
    %1183 = vsyncpa [#allocation5], 1

</llo_original>
